<compile_context>
chip_gen: v7x
topology: tpu7x:2x2x1
jax: 0.10.0
libtpu: 0.0.40
codegen_flags: <defaults>
</compile_context>

<pallas_src>
import jax
import jax.numpy as jnp
from jax.experimental import pallas as pl
from jax.experimental.pallas import tpu as pltpu

N_EMBD = 128
N_HEAD = 6
HEAD_SIZE = N_EMBD // N_HEAD      # 21 (matches the PyTorch module exactly)
HIDDEN = 4 * N_EMBD               # 512
EPS = 1e-5                        # torch.nn.LayerNorm default
LANE = 128                        # lane-tile width; Q/K/V each padded to one


def _layernorm(z, g, b):
    m = jnp.mean(z, axis=-1, keepdims=True)
    v = jnp.mean(jnp.square(z - m), axis=-1, keepdims=True)
    return (z - m) * jax.lax.rsqrt(v + EPS) * g + b


# --------------------------------------------------------------------------
# Fused kernel: LN1 + MHA + proj + residual + LN2 + FFN + residual
# --------------------------------------------------------------------------
def block_kernel(x_ref, ln1g_ref, ln1b_ref, wqkv_ref, wp_ref, bp_ref,
                 ln2g_ref, ln2b_ref, w1_ref, b1_ref, w2_ref, b2_ref, o_ref):
    bb, t, c = x_ref.shape
    x = x_ref[...].reshape(bb * t, c)                        # (M, C) f32

    # ---------------- LayerNorm 1 (f32 VPU) ----------------
    xn = _layernorm(x, ln1g_ref[...], ln1b_ref[...])

    # ------- fused QKV projection: one bf16 (M,128)@(128,384) matmul -------
    qkv = jnp.dot(xn.astype(jnp.bfloat16), wqkv_ref[...],
                  preferred_element_type=jnp.float32)        # (M, 3*128) f32
    qkv = qkv.reshape(bb, t, 3 * LANE)

    row = jax.lax.broadcasted_iota(jnp.int32, (t, t), 0)
    col = jax.lax.broadcasted_iota(jnp.int32, (t, t), 1)
    causal = col <= row

    heads = []
    for h in range(N_HEAD):                                  # unrolled (6 heads)
        q = qkv[:, :, HEAD_SIZE * h:HEAD_SIZE * (h + 1)]                  # (bb,t,21)
        k = qkv[:, :, LANE + HEAD_SIZE * h:LANE + HEAD_SIZE * (h + 1)]
        v = qkv[:, :, 2 * LANE + HEAD_SIZE * h:2 * LANE + HEAD_SIZE * (h + 1)]
        # scores (scale already folded into the Q weight columns)
        wei = jnp.einsum('bqd,bkd->bqk', q.astype(jnp.bfloat16),
                         k.astype(jnp.bfloat16),
                         preferred_element_type=jnp.float32)              # (bb,t,t)
        wei = jnp.where(causal, wei, -1e30)
        wei = wei - jnp.max(wei, axis=-1, keepdims=True)
        p = jnp.exp(wei)
        p = p * pl.reciprocal(jnp.sum(p, axis=-1, keepdims=True), approx=True)
        # dropout(p) -> identity in eval mode
        heads.append(jnp.einsum('bqk,bkd->bqd', p.astype(jnp.bfloat16),
                                v.astype(jnp.bfloat16),
                                preferred_element_type=jnp.float32))      # (bb,t,21)

    # concat the 6x21-lane head outputs inside one 128-lane tile (+2 zero pad)
    heads.append(jnp.zeros((bb, t, LANE - N_HEAD * HEAD_SIZE), jnp.float32))
    cat = jnp.concatenate(heads, axis=-1).reshape(bb * t, LANE)
    sa = jnp.dot(cat.astype(jnp.bfloat16), wp_ref[...],
                 preferred_element_type=jnp.float32) + bp_ref[...]
    # dropout(sa) -> identity in eval mode
    x1 = x + sa                                              # residual 1 (f32)

    # ---------------- LayerNorm 2 + FFN ----------------
    xn2 = _layernorm(x1, ln2g_ref[...], ln2b_ref[...])
    hid = jnp.dot(xn2.astype(jnp.bfloat16), w1_ref[...],
                  preferred_element_type=jnp.float32)        # (M, 4C)
    hid = jnp.maximum(hid + b1_ref[...], 0.0)                # bias + ReLU in f32
    y = jnp.dot(hid.astype(jnp.bfloat16), w2_ref[...],
                preferred_element_type=jnp.float32) + b2_ref[...]
    # dropout(y) -> identity in eval mode
    o_ref[...] = (x1 + y).reshape(bb, t, c).astype(o_ref.dtype)


def _pick_bb(B, T):
    """Batch-block size: pack enough rows (<=512) per grid step to fill the
    MXU M dim, keep >=2 parallel grid steps when B >= 2 (v7x has 2 TCs), and
    require BB | B so no host-side pad/slice is ever needed."""
    best = 1
    for bb in range(1, B + 1):
        if B % bb:
            continue
        if bb * T > 512:
            continue
        if B >= 2 and B // bb < 2:
            continue
        best = bb
    return best


def block_forward(x, p):
    B, T, C = x.shape
    assert C == N_EMBD
    BB = _pick_bb(B, T)
    grid = B // BB
    nh_hs = N_HEAD * HEAD_SIZE                     # 126

    # Host-side weight prep (constant-folded under jit):
    #  * fold 1/sqrt(head_size) into Wq,
    #  * fuse per-head Q/K/V into one (128, 384) bf16 weight, Q/K/V each padded
    #    to a full 128-lane tile so per-head slices stay tile-local,
    #  * flatten Wproj to (126,128), zero-pad K to 128, cast to bf16.
    def _flat(w):                                  # (NH, C, HS) -> (C, NH*HS)
        return jnp.transpose(w, (1, 0, 2)).reshape(C, nh_hs)

    scale = HEAD_SIZE ** -0.5
    wqkv = jnp.zeros((C, 3 * LANE), jnp.float32)
    wqkv = wqkv.at[:, 0:nh_hs].set(_flat(p["wq"]) * scale)
    wqkv = wqkv.at[:, LANE:LANE + nh_hs].set(_flat(p["wk"]))
    wqkv = wqkv.at[:, 2 * LANE:2 * LANE + nh_hs].set(_flat(p["wv"]))
    wqkv = wqkv.astype(jnp.bfloat16)

    wp = jnp.zeros((LANE, C), jnp.float32)
    wp = wp.at[:nh_hs].set(p["wp"].reshape(nh_hs, C)).astype(jnp.bfloat16)
    w1 = p["w1"].astype(jnp.bfloat16)
    w2 = p["w2"].astype(jnp.bfloat16)

    M = B * T
    cost = pl.CostEstimate(
        flops=(2 * M * C * 3 * LANE                     # fused QKV matmul
               + 4 * B * N_HEAD * T * T * HEAD_SIZE     # scores + PV
               + 2 * M * LANE * C                       # output projection
               + 4 * M * C * HIDDEN),                   # FFN matmuls
        transcendentals=B * N_HEAD * T * T + 3 * M,     # exp + rsqrt/recip
        bytes_accessed=(2 * M * C * 4                               # x in + out
                        + (3 * LANE * C + LANE * C + 2 * C * HIDDEN) * 2  # bf16 W
                        + (5 * C + HIDDEN) * 4))                    # LN/bias vecs

    return pl.pallas_call(
        block_kernel,
        out_shape=jax.ShapeDtypeStruct((B, T, C), x.dtype),
        grid_spec=pltpu.PrefetchScalarGridSpec(
            num_scalar_prefetch=0,
            grid=(grid,),
            in_specs=[
                pl.BlockSpec((BB, T, C), lambda i: (i, 0, 0)),       # x block
                pl.BlockSpec((1, C), lambda i: (0, 0)),              # ln1 gamma
                pl.BlockSpec((1, C), lambda i: (0, 0)),              # ln1 beta
                pl.BlockSpec((C, 3 * LANE), lambda i: (0, 0)),       # fused QKV (bf16)
                pl.BlockSpec((LANE, C), lambda i: (0, 0)),           # Wproj (bf16)
                pl.BlockSpec((1, C), lambda i: (0, 0)),              # bproj
                pl.BlockSpec((1, C), lambda i: (0, 0)),              # ln2 gamma
                pl.BlockSpec((1, C), lambda i: (0, 0)),              # ln2 beta
                pl.BlockSpec((C, HIDDEN), lambda i: (0, 0)),         # W1 (bf16)
                pl.BlockSpec((1, HIDDEN), lambda i: (0, 0)),         # b1
                pl.BlockSpec((HIDDEN, C), lambda i: (0, 0)),         # W2 (bf16)
                pl.BlockSpec((1, C), lambda i: (0, 0)),              # b2
            ],
            out_specs=pl.BlockSpec((BB, T, C), lambda i: (i, 0, 0)),
        ),
        compiler_params=pltpu.CompilerParams(
            dimension_semantics=("parallel",)),
        cost_estimate=cost,
    )(x, p["ln1_g"].reshape(1, C), p["ln1_b"].reshape(1, C), wqkv, wp,
      p["bp"].reshape(1, C), p["ln2_g"].reshape(1, C), p["ln2_b"].reshape(1, C),
      w1, p["b1"].reshape(1, HIDDEN), w2, p["b2"].reshape(1, C))


# --------------------------------------------------------------------------
# Params + pure-JAX (f32) reference
# --------------------------------------------------------------------------
def init_params(key):
    ks = jax.random.split(key, 9)

    def uni(k, shape, fan_in):
        bound = fan_in ** -0.5
        return jax.random.uniform(k, shape, jnp.float32, -bound, bound)

    return {
        "ln1_g": jnp.ones((N_EMBD,), jnp.float32),
        "ln1_b": jnp.zeros((N_EMBD,), jnp.float32),
        "ln2_g": jnp.ones((N_EMBD,), jnp.float32),
        "ln2_b": jnp.zeros((N_EMBD,), jnp.float32),
        "wq": uni(ks[0], (N_HEAD, N_EMBD, HEAD_SIZE), N_EMBD),
        "wk": uni(ks[1], (N_HEAD, N_EMBD, HEAD_SIZE), N_EMBD),
        "wv": uni(ks[2], (N_HEAD, N_EMBD, HEAD_SIZE), N_EMBD),
        "wp": uni(ks[3], (N_HEAD, HEAD_SIZE, N_EMBD), N_HEAD * HEAD_SIZE),
        "bp": uni(ks[4], (N_EMBD,), N_HEAD * HEAD_SIZE),
        "w1": uni(ks[5], (N_EMBD, HIDDEN), N_EMBD),
        "b1": uni(ks[6], (HIDDEN,), N_EMBD),
        "w2": uni(ks[7], (HIDDEN, N_EMBD), HIDDEN),
        "b2": uni(ks[8], (N_EMBD,), HIDDEN),
    }


def ref_block(x, p):
    def ln(z, g, b):
        m = jnp.mean(z, axis=-1, keepdims=True)
        v = jnp.mean(jnp.square(z - m), axis=-1, keepdims=True)
        return (z - m) * jax.lax.rsqrt(v + EPS) * g + b

    B, T, C = x.shape
    xn = ln(x, p["ln1_g"], p["ln1_b"])
    mask = jnp.tril(jnp.ones((T, T), bool))
    heads = []
    for h in range(N_HEAD):
        q = xn @ p["wq"][h]
        k = xn @ p["wk"][h]
        v = xn @ p["wv"][h]
        wei = (q @ jnp.swapaxes(k, -1, -2)) * HEAD_SIZE ** -0.5
        wei = jnp.where(mask, wei, -jnp.inf)
        wei = jax.nn.softmax(wei, axis=-1)
        heads.append(wei @ v)
    cat = jnp.concatenate(heads, axis=-1)
    sa = cat @ p["wp"].reshape(N_HEAD * HEAD_SIZE, C) + p["bp"]
    x = x + sa
    xn2 = ln(x, p["ln2_g"], p["ln2_b"])
    ff = jnp.maximum(xn2 @ p["w1"] + p["b1"], 0.0) @ p["w2"] + p["b2"]
    return x + ff


if __name__ == "__main__":
    key = jax.random.PRNGKey(0)
    kx, kp = jax.random.split(key)
    B, T = 2, 8
    x = jax.random.normal(kx, (B, T, N_EMBD), jnp.float32)
    params = init_params(kp)

    y = jax.jit(block_forward)(x, params)
    jax.block_until_ready(y)

    ref = ref_block(x, params)
    assert y.shape == (B, T, N_EMBD)
    # All matmuls use bf16 MXU inputs (f32 accumulation) + EUP approx
    # reciprocal in softmax -> tolerance loosened vs. the f32 reference.
    assert jnp.allclose(y, ref, atol=5e-2, rtol=5e-2), \
        float(jnp.max(jnp.abs(y - ref)))

    print("KERNEL_OK")
</pallas_src>

<mosaic_0001>
module attributes {stable_mosaic.version = 11 : i64} {
  func.func @block_kernel(%arg0: i32, %arg1: memref<1x8x128xf32, #tpu.memory_space<vmem>>, %arg2: memref<1x128xf32, #tpu.memory_space<vmem>>, %arg3: memref<1x128xf32, #tpu.memory_space<vmem>>, %arg4: memref<128x384xbf16, #tpu.memory_space<vmem>>, %arg5: memref<128x128xbf16, #tpu.memory_space<vmem>>, %arg6: memref<1x128xf32, #tpu.memory_space<vmem>>, %arg7: memref<1x128xf32, #tpu.memory_space<vmem>>, %arg8: memref<1x128xf32, #tpu.memory_space<vmem>>, %arg9: memref<128x512xbf16, #tpu.memory_space<vmem>>, %arg10: memref<1x512xf32, #tpu.memory_space<vmem>>, %arg11: memref<512x128xbf16, #tpu.memory_space<vmem>>, %arg12: memref<1x128xf32, #tpu.memory_space<vmem>>, %arg13: memref<1x8x128xf32, #tpu.memory_space<vmem>>) attributes {dimension_semantics = [#tpu.dimension_semantics<parallel>], iteration_bounds = array<i64: 2>, scalar_prefetch = 0 : i64, scratch_operands = 0 : i64, tpu.core_type = #tpu.core_type<tc>, window_params = [{transform_indices = @transform_0, window_bounds = array<i64: 1, 8, 128>}, {pipeline_mode = #tpu.pipeline_mode<synchronous>, transform_indices = @transform_1, window_bounds = array<i64: 1, 128>}, {pipeline_mode = #tpu.pipeline_mode<synchronous>, transform_indices = @transform_2, window_bounds = array<i64: 1, 128>}, {pipeline_mode = #tpu.pipeline_mode<synchronous>, transform_indices = @transform_3, window_bounds = array<i64: 128, 384>}, {pipeline_mode = #tpu.pipeline_mode<synchronous>, transform_indices = @transform_4, window_bounds = array<i64: 128, 128>}, {pipeline_mode = #tpu.pipeline_mode<synchronous>, transform_indices = @transform_5, window_bounds = array<i64: 1, 128>}, {pipeline_mode = #tpu.pipeline_mode<synchronous>, transform_indices = @transform_6, window_bounds = array<i64: 1, 128>}, {pipeline_mode = #tpu.pipeline_mode<synchronous>, transform_indices = @transform_7, window_bounds = array<i64: 1, 128>}, {pipeline_mode = #tpu.pipeline_mode<synchronous>, transform_indices = @transform_8, window_bounds = array<i64: 128, 512>}, {pipeline_mode = #tpu.pipeline_mode<synchronous>, transform_indices = @transform_9, window_bounds = array<i64: 1, 512>}, {pipeline_mode = #tpu.pipeline_mode<synchronous>, transform_indices = @transform_10, window_bounds = array<i64: 512, 128>}, {pipeline_mode = #tpu.pipeline_mode<synchronous>, transform_indices = @transform_11, window_bounds = array<i64: 1, 128>}, {transform_indices = @transform_12, window_bounds = array<i64: 1, 8, 128>}]} {
    %c0 = arith.constant 0 : index
    %c0_0 = arith.constant 0 : index
    %c0_1 = arith.constant 0 : index
    %0 = vector.load %arg1[%c0, %c0_0, %c0_1] : memref<1x8x128xf32, #tpu.memory_space<vmem>>, vector<1x8x128xf32>
    %1 = vector.shape_cast %0 : vector<1x8x128xf32> to vector<8x128xf32>
    %c0_2 = arith.constant 0 : index
    %c0_3 = arith.constant 0 : index
    %2 = vector.load %arg2[%c0_2, %c0_3] : memref<1x128xf32, #tpu.memory_space<vmem>>, vector<1x128xf32>
    %c0_4 = arith.constant 0 : index
    %c0_5 = arith.constant 0 : index
    %3 = vector.load %arg3[%c0_4, %c0_5] : memref<1x128xf32, #tpu.memory_space<vmem>>, vector<1x128xf32>
    %cst = arith.constant dense<0.000000e+00> : vector<8xf32>
    %4 = vector.multi_reduction <add>, %1, %cst [1] : vector<8x128xf32> to vector<8xf32>
    %5 = vector.shape_cast %4 : vector<8xf32> to vector<8x1xf32>
    %cst_6 = arith.constant 1.280000e+02 : f32
    %6 = vector.broadcast %cst_6 : f32 to vector<8x1xf32>
    %7 = arith.divf %5, %6 : vector<8x1xf32>
    %8 = vector.broadcast %7 : vector<8x1xf32> to vector<8x128xf32>
    %9 = arith.subf %1, %8 : vector<8x128xf32>
    %10 = arith.mulf %9, %9 : vector<8x128xf32>
    %cst_7 = arith.constant dense<0.000000e+00> : vector<8xf32>
    %11 = vector.multi_reduction <add>, %10, %cst_7 [1] : vector<8x128xf32> to vector<8xf32>
    %12 = vector.shape_cast %11 : vector<8xf32> to vector<8x1xf32>
    %cst_8 = arith.constant 1.280000e+02 : f32
    %13 = vector.broadcast %cst_8 : f32 to vector<8x1xf32>
    %14 = arith.divf %12, %13 : vector<8x1xf32>
    %15 = vector.broadcast %7 : vector<8x1xf32> to vector<8x128xf32>
    %16 = arith.subf %1, %15 : vector<8x128xf32>
    %cst_9 = arith.constant 9.99999974E-6 : f32
    %17 = vector.broadcast %cst_9 : f32 to vector<8x1xf32>
    %18 = arith.addf %14, %17 : vector<8x1xf32>
    %19 = math.rsqrt %18 : vector<8x1xf32>
    %20 = vector.broadcast %19 : vector<8x1xf32> to vector<8x128xf32>
    %21 = arith.mulf %16, %20 : vector<8x128xf32>
    %22 = vector.broadcast %2 : vector<1x128xf32> to vector<8x128xf32>
    %23 = arith.mulf %21, %22 : vector<8x128xf32>
    %24 = vector.broadcast %3 : vector<1x128xf32> to vector<8x128xf32>
    %25 = arith.addf %23, %24 : vector<8x128xf32>
    %26 = arith.truncf %25 : vector<8x128xf32> to vector<8x128xbf16>
    %c0_10 = arith.constant 0 : index
    %c0_11 = arith.constant 0 : index
    %27 = vector.load %arg4[%c0_10, %c0_11] : memref<128x384xbf16, #tpu.memory_space<vmem>>, vector<128x384xbf16>
    %cst_12 = arith.constant dense<0.000000e+00> : vector<8x384xf32>
    %28 = tpu.matmul %26, %27, %cst_12 {dimension_numbers = #tpu.dot_dimension_numbers<[1], [0], [0], [1], [0, 0, 1, 1], [], []>} : vector<8x128xbf16>, vector<128x384xbf16>, vector<8x384xf32> -> vector<8x384xf32>
    %29 = vector.shape_cast %28 : vector<8x384xf32> to vector<1x8x384xf32>
    %30 = tpu.iota {dimensions = array<i32: 0>} : vector<8x8xi32>
    %31 = tpu.iota {dimensions = array<i32: 1>} : vector<8x8xi32>
    %32 = arith.cmpi sle, %31, %30 : vector<8x8xi32>
    %33 = vector.extract_strided_slice %29 {offsets = [0, 0, 0], sizes = [1, 8, 21], strides = [1, 1, 1]} : vector<1x8x384xf32> to vector<1x8x21xf32>
    %34 = vector.extract_strided_slice %29 {offsets = [0, 0, 128], sizes = [1, 8, 21], strides = [1, 1, 1]} : vector<1x8x384xf32> to vector<1x8x21xf32>
    %35 = vector.extract_strided_slice %29 {offsets = [0, 0, 256], sizes = [1, 8, 21], strides = [1, 1, 1]} : vector<1x8x384xf32> to vector<1x8x21xf32>
    %36 = arith.truncf %33 : vector<1x8x21xf32> to vector<1x8x21xbf16>
    %37 = arith.truncf %34 : vector<1x8x21xf32> to vector<1x8x21xbf16>
    "tpu.trace_start"() <{level = 10 : i32, message = "bqd,bkd->bqk"}> : () -> ()
    %cst_13 = arith.constant dense<0.000000e+00> : vector<1x8x8xf32>
    %38 = tpu.matmul %36, %37, %cst_13 {dimension_numbers = #tpu.dot_dimension_numbers<[2], [2], [1], [1], [0, 0, 0, 1, 1, 1], [0], [0]>} : vector<1x8x21xbf16>, vector<1x8x21xbf16>, vector<1x8x8xf32> -> vector<1x8x8xf32>
    %cst_14 = arith.constant -1.000000e+30 : f32
    "tpu.trace_stop"() : () -> ()
    %39 = vector.shape_cast %32 : vector<8x8xi1> to vector<1x8x8xi1>
    %40 = vector.broadcast %cst_14 : f32 to vector<1x8x8xf32>
    %41 = arith.select %39, %38, %40 : vector<1x8x8xi1>, vector<1x8x8xf32>
    %cst_15 = arith.constant dense<0xFF800000> : vector<1x8xf32>
    %42 = vector.multi_reduction <maximumf>, %41, %cst_15 [2] : vector<1x8x8xf32> to vector<1x8xf32>
    %43 = vector.shape_cast %42 : vector<1x8xf32> to vector<1x8x1xf32>
    %44 = vector.broadcast %43 : vector<1x8x1xf32> to vector<1x8x8xf32>
    %45 = arith.subf %41, %44 : vector<1x8x8xf32>
    %46 = math.exp %45 : vector<1x8x8xf32>
    %cst_16 = arith.constant dense<0.000000e+00> : vector<1x8xf32>
    %47 = vector.multi_reduction <add>, %46, %cst_16 [2] : vector<1x8x8xf32> to vector<1x8xf32>
    %48 = vector.shape_cast %47 : vector<1x8xf32> to vector<1x8x1xf32>
    %49 = tpu.reciprocal %48 {approx = true} : vector<1x8x1xf32> -> vector<1x8x1xf32>
    %50 = vector.broadcast %49 : vector<1x8x1xf32> to vector<1x8x8xf32>
    %51 = arith.mulf %46, %50 : vector<1x8x8xf32>
    %52 = arith.truncf %51 : vector<1x8x8xf32> to vector<1x8x8xbf16>
    %53 = arith.truncf %35 : vector<1x8x21xf32> to vector<1x8x21xbf16>
    "tpu.trace_start"() <{level = 10 : i32, message = "bqk,bkd->bqd"}> : () -> ()
    %cst_17 = arith.constant dense<0.000000e+00> : vector<1x8x21xf32>
    %54 = tpu.matmul %52, %53, %cst_17 {dimension_numbers = #tpu.dot_dimension_numbers<[2], [1], [1], [2], [0, 0, 0, 1, 1, 2], [0], [0]>} : vector<1x8x8xbf16>, vector<1x8x21xbf16>, vector<1x8x21xf32> -> vector<1x8x21xf32>
    "tpu.trace_stop"() : () -> ()
    %55 = vector.extract_strided_slice %29 {offsets = [0, 0, 21], sizes = [1, 8, 21], strides = [1, 1, 1]} : vector<1x8x384xf32> to vector<1x8x21xf32>
    %56 = vector.extract_strided_slice %29 {offsets = [0, 0, 149], sizes = [1, 8, 21], strides = [1, 1, 1]} : vector<1x8x384xf32> to vector<1x8x21xf32>
    %57 = vector.extract_strided_slice %29 {offsets = [0, 0, 277], sizes = [1, 8, 21], strides = [1, 1, 1]} : vector<1x8x384xf32> to vector<1x8x21xf32>
    %58 = arith.truncf %55 : vector<1x8x21xf32> to vector<1x8x21xbf16>
    %59 = arith.truncf %56 : vector<1x8x21xf32> to vector<1x8x21xbf16>
    "tpu.trace_start"() <{level = 10 : i32, message = "bqd,bkd->bqk"}> : () -> ()
    %cst_18 = arith.constant dense<0.000000e+00> : vector<1x8x8xf32>
    %60 = tpu.matmul %58, %59, %cst_18 {dimension_numbers = #tpu.dot_dimension_numbers<[2], [2], [1], [1], [0, 0, 0, 1, 1, 1], [0], [0]>} : vector<1x8x21xbf16>, vector<1x8x21xbf16>, vector<1x8x8xf32> -> vector<1x8x8xf32>
    %cst_19 = arith.constant -1.000000e+30 : f32
    "tpu.trace_stop"() : () -> ()
    %61 = vector.shape_cast %32 : vector<8x8xi1> to vector<1x8x8xi1>
    %62 = vector.broadcast %cst_19 : f32 to vector<1x8x8xf32>
    %63 = arith.select %61, %60, %62 : vector<1x8x8xi1>, vector<1x8x8xf32>
    %cst_20 = arith.constant dense<0xFF800000> : vector<1x8xf32>
    %64 = vector.multi_reduction <maximumf>, %63, %cst_20 [2] : vector<1x8x8xf32> to vector<1x8xf32>
    %65 = vector.shape_cast %64 : vector<1x8xf32> to vector<1x8x1xf32>
    %66 = vector.broadcast %65 : vector<1x8x1xf32> to vector<1x8x8xf32>
    %67 = arith.subf %63, %66 : vector<1x8x8xf32>
    %68 = math.exp %67 : vector<1x8x8xf32>
    %cst_21 = arith.constant dense<0.000000e+00> : vector<1x8xf32>
    %69 = vector.multi_reduction <add>, %68, %cst_21 [2] : vector<1x8x8xf32> to vector<1x8xf32>
    %70 = vector.shape_cast %69 : vector<1x8xf32> to vector<1x8x1xf32>
    %71 = tpu.reciprocal %70 {approx = true} : vector<1x8x1xf32> -> vector<1x8x1xf32>
    %72 = vector.broadcast %71 : vector<1x8x1xf32> to vector<1x8x8xf32>
    %73 = arith.mulf %68, %72 : vector<1x8x8xf32>
    %74 = arith.truncf %73 : vector<1x8x8xf32> to vector<1x8x8xbf16>
    %75 = arith.truncf %57 : vector<1x8x21xf32> to vector<1x8x21xbf16>
    "tpu.trace_start"() <{level = 10 : i32, message = "bqk,bkd->bqd"}> : () -> ()
    %cst_22 = arith.constant dense<0.000000e+00> : vector<1x8x21xf32>
    %76 = tpu.matmul %74, %75, %cst_22 {dimension_numbers = #tpu.dot_dimension_numbers<[2], [1], [1], [2], [0, 0, 0, 1, 1, 2], [0], [0]>} : vector<1x8x8xbf16>, vector<1x8x21xbf16>, vector<1x8x21xf32> -> vector<1x8x21xf32>
    "tpu.trace_stop"() : () -> ()
    %77 = vector.extract_strided_slice %29 {offsets = [0, 0, 42], sizes = [1, 8, 21], strides = [1, 1, 1]} : vector<1x8x384xf32> to vector<1x8x21xf32>
    %78 = vector.extract_strided_slice %29 {offsets = [0, 0, 170], sizes = [1, 8, 21], strides = [1, 1, 1]} : vector<1x8x384xf32> to vector<1x8x21xf32>
    %79 = vector.extract_strided_slice %29 {offsets = [0, 0, 298], sizes = [1, 8, 21], strides = [1, 1, 1]} : vector<1x8x384xf32> to vector<1x8x21xf32>
    %80 = arith.truncf %77 : vector<1x8x21xf32> to vector<1x8x21xbf16>
    %81 = arith.truncf %78 : vector<1x8x21xf32> to vector<1x8x21xbf16>
    "tpu.trace_start"() <{level = 10 : i32, message = "bqd,bkd->bqk"}> : () -> ()
    %cst_23 = arith.constant dense<0.000000e+00> : vector<1x8x8xf32>
    %82 = tpu.matmul %80, %81, %cst_23 {dimension_numbers = #tpu.dot_dimension_numbers<[2], [2], [1], [1], [0, 0, 0, 1, 1, 1], [0], [0]>} : vector<1x8x21xbf16>, vector<1x8x21xbf16>, vector<1x8x8xf32> -> vector<1x8x8xf32>
    %cst_24 = arith.constant -1.000000e+30 : f32
    "tpu.trace_stop"() : () -> ()
    %83 = vector.shape_cast %32 : vector<8x8xi1> to vector<1x8x8xi1>
    %84 = vector.broadcast %cst_24 : f32 to vector<1x8x8xf32>
    %85 = arith.select %83, %82, %84 : vector<1x8x8xi1>, vector<1x8x8xf32>
    %cst_25 = arith.constant dense<0xFF800000> : vector<1x8xf32>
    %86 = vector.multi_reduction <maximumf>, %85, %cst_25 [2] : vector<1x8x8xf32> to vector<1x8xf32>
    %87 = vector.shape_cast %86 : vector<1x8xf32> to vector<1x8x1xf32>
    %88 = vector.broadcast %87 : vector<1x8x1xf32> to vector<1x8x8xf32>
    %89 = arith.subf %85, %88 : vector<1x8x8xf32>
    %90 = math.exp %89 : vector<1x8x8xf32>
    %cst_26 = arith.constant dense<0.000000e+00> : vector<1x8xf32>
    %91 = vector.multi_reduction <add>, %90, %cst_26 [2] : vector<1x8x8xf32> to vector<1x8xf32>
    %92 = vector.shape_cast %91 : vector<1x8xf32> to vector<1x8x1xf32>
    %93 = tpu.reciprocal %92 {approx = true} : vector<1x8x1xf32> -> vector<1x8x1xf32>
    %94 = vector.broadcast %93 : vector<1x8x1xf32> to vector<1x8x8xf32>
    %95 = arith.mulf %90, %94 : vector<1x8x8xf32>
    %96 = arith.truncf %95 : vector<1x8x8xf32> to vector<1x8x8xbf16>
    %97 = arith.truncf %79 : vector<1x8x21xf32> to vector<1x8x21xbf16>
    "tpu.trace_start"() <{level = 10 : i32, message = "bqk,bkd->bqd"}> : () -> ()
    %cst_27 = arith.constant dense<0.000000e+00> : vector<1x8x21xf32>
    %98 = tpu.matmul %96, %97, %cst_27 {dimension_numbers = #tpu.dot_dimension_numbers<[2], [1], [1], [2], [0, 0, 0, 1, 1, 2], [0], [0]>} : vector<1x8x8xbf16>, vector<1x8x21xbf16>, vector<1x8x21xf32> -> vector<1x8x21xf32>
    "tpu.trace_stop"() : () -> ()
    %99 = vector.extract_strided_slice %29 {offsets = [0, 0, 63], sizes = [1, 8, 21], strides = [1, 1, 1]} : vector<1x8x384xf32> to vector<1x8x21xf32>
    %100 = vector.extract_strided_slice %29 {offsets = [0, 0, 191], sizes = [1, 8, 21], strides = [1, 1, 1]} : vector<1x8x384xf32> to vector<1x8x21xf32>
    %101 = vector.extract_strided_slice %29 {offsets = [0, 0, 319], sizes = [1, 8, 21], strides = [1, 1, 1]} : vector<1x8x384xf32> to vector<1x8x21xf32>
    %102 = arith.truncf %99 : vector<1x8x21xf32> to vector<1x8x21xbf16>
    %103 = arith.truncf %100 : vector<1x8x21xf32> to vector<1x8x21xbf16>
    "tpu.trace_start"() <{level = 10 : i32, message = "bqd,bkd->bqk"}> : () -> ()
    %cst_28 = arith.constant dense<0.000000e+00> : vector<1x8x8xf32>
    %104 = tpu.matmul %102, %103, %cst_28 {dimension_numbers = #tpu.dot_dimension_numbers<[2], [2], [1], [1], [0, 0, 0, 1, 1, 1], [0], [0]>} : vector<1x8x21xbf16>, vector<1x8x21xbf16>, vector<1x8x8xf32> -> vector<1x8x8xf32>
    %cst_29 = arith.constant -1.000000e+30 : f32
    "tpu.trace_stop"() : () -> ()
    %105 = vector.shape_cast %32 : vector<8x8xi1> to vector<1x8x8xi1>
    %106 = vector.broadcast %cst_29 : f32 to vector<1x8x8xf32>
    %107 = arith.select %105, %104, %106 : vector<1x8x8xi1>, vector<1x8x8xf32>
    %cst_30 = arith.constant dense<0xFF800000> : vector<1x8xf32>
    %108 = vector.multi_reduction <maximumf>, %107, %cst_30 [2] : vector<1x8x8xf32> to vector<1x8xf32>
    %109 = vector.shape_cast %108 : vector<1x8xf32> to vector<1x8x1xf32>
    %110 = vector.broadcast %109 : vector<1x8x1xf32> to vector<1x8x8xf32>
    %111 = arith.subf %107, %110 : vector<1x8x8xf32>
    %112 = math.exp %111 : vector<1x8x8xf32>
    %cst_31 = arith.constant dense<0.000000e+00> : vector<1x8xf32>
    %113 = vector.multi_reduction <add>, %112, %cst_31 [2] : vector<1x8x8xf32> to vector<1x8xf32>
    %114 = vector.shape_cast %113 : vector<1x8xf32> to vector<1x8x1xf32>
    %115 = tpu.reciprocal %114 {approx = true} : vector<1x8x1xf32> -> vector<1x8x1xf32>
    %116 = vector.broadcast %115 : vector<1x8x1xf32> to vector<1x8x8xf32>
    %117 = arith.mulf %112, %116 : vector<1x8x8xf32>
    %118 = arith.truncf %117 : vector<1x8x8xf32> to vector<1x8x8xbf16>
    %119 = arith.truncf %101 : vector<1x8x21xf32> to vector<1x8x21xbf16>
    "tpu.trace_start"() <{level = 10 : i32, message = "bqk,bkd->bqd"}> : () -> ()
    %cst_32 = arith.constant dense<0.000000e+00> : vector<1x8x21xf32>
    %120 = tpu.matmul %118, %119, %cst_32 {dimension_numbers = #tpu.dot_dimension_numbers<[2], [1], [1], [2], [0, 0, 0, 1, 1, 2], [0], [0]>} : vector<1x8x8xbf16>, vector<1x8x21xbf16>, vector<1x8x21xf32> -> vector<1x8x21xf32>
    "tpu.trace_stop"() : () -> ()
    %121 = vector.extract_strided_slice %29 {offsets = [0, 0, 84], sizes = [1, 8, 21], strides = [1, 1, 1]} : vector<1x8x384xf32> to vector<1x8x21xf32>
    %122 = vector.extract_strided_slice %29 {offsets = [0, 0, 212], sizes = [1, 8, 21], strides = [1, 1, 1]} : vector<1x8x384xf32> to vector<1x8x21xf32>
    %123 = vector.extract_strided_slice %29 {offsets = [0, 0, 340], sizes = [1, 8, 21], strides = [1, 1, 1]} : vector<1x8x384xf32> to vector<1x8x21xf32>
    %124 = arith.truncf %121 : vector<1x8x21xf32> to vector<1x8x21xbf16>
    %125 = arith.truncf %122 : vector<1x8x21xf32> to vector<1x8x21xbf16>
    "tpu.trace_start"() <{level = 10 : i32, message = "bqd,bkd->bqk"}> : () -> ()
    %cst_33 = arith.constant dense<0.000000e+00> : vector<1x8x8xf32>
    %126 = tpu.matmul %124, %125, %cst_33 {dimension_numbers = #tpu.dot_dimension_numbers<[2], [2], [1], [1], [0, 0, 0, 1, 1, 1], [0], [0]>} : vector<1x8x21xbf16>, vector<1x8x21xbf16>, vector<1x8x8xf32> -> vector<1x8x8xf32>
    %cst_34 = arith.constant -1.000000e+30 : f32
    "tpu.trace_stop"() : () -> ()
    %127 = vector.shape_cast %32 : vector<8x8xi1> to vector<1x8x8xi1>
    %128 = vector.broadcast %cst_34 : f32 to vector<1x8x8xf32>
    %129 = arith.select %127, %126, %128 : vector<1x8x8xi1>, vector<1x8x8xf32>
    %cst_35 = arith.constant dense<0xFF800000> : vector<1x8xf32>
    %130 = vector.multi_reduction <maximumf>, %129, %cst_35 [2] : vector<1x8x8xf32> to vector<1x8xf32>
    %131 = vector.shape_cast %130 : vector<1x8xf32> to vector<1x8x1xf32>
    %132 = vector.broadcast %131 : vector<1x8x1xf32> to vector<1x8x8xf32>
    %133 = arith.subf %129, %132 : vector<1x8x8xf32>
    %134 = math.exp %133 : vector<1x8x8xf32>
    %cst_36 = arith.constant dense<0.000000e+00> : vector<1x8xf32>
    %135 = vector.multi_reduction <add>, %134, %cst_36 [2] : vector<1x8x8xf32> to vector<1x8xf32>
    %136 = vector.shape_cast %135 : vector<1x8xf32> to vector<1x8x1xf32>
    %137 = tpu.reciprocal %136 {approx = true} : vector<1x8x1xf32> -> vector<1x8x1xf32>
    %138 = vector.broadcast %137 : vector<1x8x1xf32> to vector<1x8x8xf32>
    %139 = arith.mulf %134, %138 : vector<1x8x8xf32>
    %140 = arith.truncf %139 : vector<1x8x8xf32> to vector<1x8x8xbf16>
    %141 = arith.truncf %123 : vector<1x8x21xf32> to vector<1x8x21xbf16>
    "tpu.trace_start"() <{level = 10 : i32, message = "bqk,bkd->bqd"}> : () -> ()
    %cst_37 = arith.constant dense<0.000000e+00> : vector<1x8x21xf32>
    %142 = tpu.matmul %140, %141, %cst_37 {dimension_numbers = #tpu.dot_dimension_numbers<[2], [1], [1], [2], [0, 0, 0, 1, 1, 2], [0], [0]>} : vector<1x8x8xbf16>, vector<1x8x21xbf16>, vector<1x8x21xf32> -> vector<1x8x21xf32>
    "tpu.trace_stop"() : () -> ()
    %143 = vector.extract_strided_slice %29 {offsets = [0, 0, 105], sizes = [1, 8, 21], strides = [1, 1, 1]} : vector<1x8x384xf32> to vector<1x8x21xf32>
    %144 = vector.extract_strided_slice %29 {offsets = [0, 0, 233], sizes = [1, 8, 21], strides = [1, 1, 1]} : vector<1x8x384xf32> to vector<1x8x21xf32>
    %145 = vector.extract_strided_slice %29 {offsets = [0, 0, 361], sizes = [1, 8, 21], strides = [1, 1, 1]} : vector<1x8x384xf32> to vector<1x8x21xf32>
    %146 = arith.truncf %143 : vector<1x8x21xf32> to vector<1x8x21xbf16>
    %147 = arith.truncf %144 : vector<1x8x21xf32> to vector<1x8x21xbf16>
    "tpu.trace_start"() <{level = 10 : i32, message = "bqd,bkd->bqk"}> : () -> ()
    %cst_38 = arith.constant dense<0.000000e+00> : vector<1x8x8xf32>
    %148 = tpu.matmul %146, %147, %cst_38 {dimension_numbers = #tpu.dot_dimension_numbers<[2], [2], [1], [1], [0, 0, 0, 1, 1, 1], [0], [0]>} : vector<1x8x21xbf16>, vector<1x8x21xbf16>, vector<1x8x8xf32> -> vector<1x8x8xf32>
    %cst_39 = arith.constant -1.000000e+30 : f32
    "tpu.trace_stop"() : () -> ()
    %149 = vector.shape_cast %32 : vector<8x8xi1> to vector<1x8x8xi1>
    %150 = vector.broadcast %cst_39 : f32 to vector<1x8x8xf32>
    %151 = arith.select %149, %148, %150 : vector<1x8x8xi1>, vector<1x8x8xf32>
    %cst_40 = arith.constant dense<0xFF800000> : vector<1x8xf32>
    %152 = vector.multi_reduction <maximumf>, %151, %cst_40 [2] : vector<1x8x8xf32> to vector<1x8xf32>
    %153 = vector.shape_cast %152 : vector<1x8xf32> to vector<1x8x1xf32>
    %154 = vector.broadcast %153 : vector<1x8x1xf32> to vector<1x8x8xf32>
    %155 = arith.subf %151, %154 : vector<1x8x8xf32>
    %156 = math.exp %155 : vector<1x8x8xf32>
    %cst_41 = arith.constant dense<0.000000e+00> : vector<1x8xf32>
    %157 = vector.multi_reduction <add>, %156, %cst_41 [2] : vector<1x8x8xf32> to vector<1x8xf32>
    %158 = vector.shape_cast %157 : vector<1x8xf32> to vector<1x8x1xf32>
    %159 = tpu.reciprocal %158 {approx = true} : vector<1x8x1xf32> -> vector<1x8x1xf32>
    %160 = vector.broadcast %159 : vector<1x8x1xf32> to vector<1x8x8xf32>
    %161 = arith.mulf %156, %160 : vector<1x8x8xf32>
    %162 = arith.truncf %161 : vector<1x8x8xf32> to vector<1x8x8xbf16>
    %163 = arith.truncf %145 : vector<1x8x21xf32> to vector<1x8x21xbf16>
    "tpu.trace_start"() <{level = 10 : i32, message = "bqk,bkd->bqd"}> : () -> ()
    %cst_42 = arith.constant dense<0.000000e+00> : vector<1x8x21xf32>
    %164 = tpu.matmul %162, %163, %cst_42 {dimension_numbers = #tpu.dot_dimension_numbers<[2], [1], [1], [2], [0, 0, 0, 1, 1, 2], [0], [0]>} : vector<1x8x8xbf16>, vector<1x8x21xbf16>, vector<1x8x21xf32> -> vector<1x8x21xf32>
    %cst_43 = arith.constant 0.000000e+00 : f32
    "tpu.trace_stop"() : () -> ()
    %165 = vector.broadcast %cst_43 : f32 to vector<1x8x2xf32>
    %166 = tpu.concatenate %54, %76, %98, %120, %142, %164, %165 in 2 : vector<1x8x21xf32>, vector<1x8x21xf32>, vector<1x8x21xf32>, vector<1x8x21xf32>, vector<1x8x21xf32>, vector<1x8x21xf32>, vector<1x8x2xf32> -> vector<1x8x128xf32>
    %167 = vector.shape_cast %166 : vector<1x8x128xf32> to vector<8x128xf32>
    %168 = arith.truncf %167 : vector<8x128xf32> to vector<8x128xbf16>
    %c0_44 = arith.constant 0 : index
    %c0_45 = arith.constant 0 : index
    %169 = vector.load %arg5[%c0_44, %c0_45] : memref<128x128xbf16, #tpu.memory_space<vmem>>, vector<128x128xbf16>
    %cst_46 = arith.constant dense<0.000000e+00> : vector<8x128xf32>
    %170 = tpu.matmul %168, %169, %cst_46 {dimension_numbers = #tpu.dot_dimension_numbers<[1], [0], [0], [1], [0, 0, 1, 1], [], []>} : vector<8x128xbf16>, vector<128x128xbf16>, vector<8x128xf32> -> vector<8x128xf32>
    %c0_47 = arith.constant 0 : index
    %c0_48 = arith.constant 0 : index
    %171 = vector.load %arg6[%c0_47, %c0_48] : memref<1x128xf32, #tpu.memory_space<vmem>>, vector<1x128xf32>
    %172 = vector.broadcast %171 : vector<1x128xf32> to vector<8x128xf32>
    %173 = arith.addf %170, %172 : vector<8x128xf32>
    %174 = arith.addf %1, %173 : vector<8x128xf32>
    %c0_49 = arith.constant 0 : index
    %c0_50 = arith.constant 0 : index
    %175 = vector.load %arg7[%c0_49, %c0_50] : memref<1x128xf32, #tpu.memory_space<vmem>>, vector<1x128xf32>
    %c0_51 = arith.constant 0 : index
    %c0_52 = arith.constant 0 : index
    %176 = vector.load %arg8[%c0_51, %c0_52] : memref<1x128xf32, #tpu.memory_space<vmem>>, vector<1x128xf32>
    %cst_53 = arith.constant dense<0.000000e+00> : vector<8xf32>
    %177 = vector.multi_reduction <add>, %174, %cst_53 [1] : vector<8x128xf32> to vector<8xf32>
    %178 = vector.shape_cast %177 : vector<8xf32> to vector<8x1xf32>
    %cst_54 = arith.constant 1.280000e+02 : f32
    %179 = vector.broadcast %cst_54 : f32 to vector<8x1xf32>
    %180 = arith.divf %178, %179 : vector<8x1xf32>
    %181 = vector.broadcast %180 : vector<8x1xf32> to vector<8x128xf32>
    %182 = arith.subf %174, %181 : vector<8x128xf32>
    %183 = arith.mulf %182, %182 : vector<8x128xf32>
    %cst_55 = arith.constant dense<0.000000e+00> : vector<8xf32>
    %184 = vector.multi_reduction <add>, %183, %cst_55 [1] : vector<8x128xf32> to vector<8xf32>
    %185 = vector.shape_cast %184 : vector<8xf32> to vector<8x1xf32>
    %cst_56 = arith.constant 1.280000e+02 : f32
    %186 = vector.broadcast %cst_56 : f32 to vector<8x1xf32>
    %187 = arith.divf %185, %186 : vector<8x1xf32>
    %188 = vector.broadcast %180 : vector<8x1xf32> to vector<8x128xf32>
    %189 = arith.subf %174, %188 : vector<8x128xf32>
    %cst_57 = arith.constant 9.99999974E-6 : f32
    %190 = vector.broadcast %cst_57 : f32 to vector<8x1xf32>
    %191 = arith.addf %187, %190 : vector<8x1xf32>
    %192 = math.rsqrt %191 : vector<8x1xf32>
    %193 = vector.broadcast %192 : vector<8x1xf32> to vector<8x128xf32>
    %194 = arith.mulf %189, %193 : vector<8x128xf32>
    %195 = vector.broadcast %175 : vector<1x128xf32> to vector<8x128xf32>
    %196 = arith.mulf %194, %195 : vector<8x128xf32>
    %197 = vector.broadcast %176 : vector<1x128xf32> to vector<8x128xf32>
    %198 = arith.addf %196, %197 : vector<8x128xf32>
    %199 = arith.truncf %198 : vector<8x128xf32> to vector<8x128xbf16>
    %c0_58 = arith.constant 0 : index
    %c0_59 = arith.constant 0 : index
    %200 = vector.load %arg9[%c0_58, %c0_59] : memref<128x512xbf16, #tpu.memory_space<vmem>>, vector<128x512xbf16>
    %cst_60 = arith.constant dense<0.000000e+00> : vector<8x512xf32>
    %201 = tpu.matmul %199, %200, %cst_60 {dimension_numbers = #tpu.dot_dimension_numbers<[1], [0], [0], [1], [0, 0, 1, 1], [], []>} : vector<8x128xbf16>, vector<128x512xbf16>, vector<8x512xf32> -> vector<8x512xf32>
    %c0_61 = arith.constant 0 : index
    %c0_62 = arith.constant 0 : index
    %202 = vector.load %arg10[%c0_61, %c0_62] : memref<1x512xf32, #tpu.memory_space<vmem>>, vector<1x512xf32>
    %203 = vector.broadcast %202 : vector<1x512xf32> to vector<8x512xf32>
    %204 = arith.addf %201, %203 : vector<8x512xf32>
    %cst_63 = arith.constant 0.000000e+00 : f32
    %205 = vector.broadcast %cst_63 : f32 to vector<8x512xf32>
    %206 = arith.maximumf %204, %205 : vector<8x512xf32>
    %207 = arith.truncf %206 : vector<8x512xf32> to vector<8x512xbf16>
    %c0_64 = arith.constant 0 : index
    %c0_65 = arith.constant 0 : index
    %208 = vector.load %arg11[%c0_64, %c0_65] : memref<512x128xbf16, #tpu.memory_space<vmem>>, vector<512x128xbf16>
    %cst_66 = arith.constant dense<0.000000e+00> : vector<8x128xf32>
    %209 = tpu.matmul %207, %208, %cst_66 {dimension_numbers = #tpu.dot_dimension_numbers<[1], [0], [0], [1], [0, 0, 1, 1], [], []>} : vector<8x512xbf16>, vector<512x128xbf16>, vector<8x128xf32> -> vector<8x128xf32>
    %c0_67 = arith.constant 0 : index
    %c0_68 = arith.constant 0 : index
    %210 = vector.load %arg12[%c0_67, %c0_68] : memref<1x128xf32, #tpu.memory_space<vmem>>, vector<1x128xf32>
    %211 = vector.broadcast %210 : vector<1x128xf32> to vector<8x128xf32>
    %212 = arith.addf %209, %211 : vector<8x128xf32>
    %213 = arith.addf %174, %212 : vector<8x128xf32>
    %214 = vector.shape_cast %213 : vector<8x128xf32> to vector<1x8x128xf32>
    %c0_69 = arith.constant 0 : index
    %c0_70 = arith.constant 0 : index
    %c0_71 = arith.constant 0 : index
    %215 = vector.load %arg13[%c0_69, %c0_70, %c0_71] : memref<1x8x128xf32, #tpu.memory_space<vmem>>, vector<1x8x128xf32>
    tpu.vector_store %arg13[%c0_69, %c0_70, %c0_71], %214 {strides = array<i32>} : memref<1x8x128xf32, #tpu.memory_space<vmem>>, vector<1x8x128xf32>,
    return
  }
  func.func @transform_0(%arg0: i32) -> (i32, i32, i32) {
    %c0_i32 = arith.constant 0 : i32
    %c0_i32_0 = arith.constant 0 : i32
    %c0_i32_1 = arith.constant 0 : i32
    return %arg0, %c0_i32, %c0_i32_0 : i32, i32, i32
  }
  func.func @transform_1(%arg0: i32) -> (i32, i32) {
    %c0_i32 = arith.constant 0 : i32
    %c0_i32_0 = arith.constant 0 : i32
    %c0_i32_1 = arith.constant 0 : i32
    return %c0_i32, %c0_i32_0 : i32, i32
  }
  func.func @transform_2(%arg0: i32) -> (i32, i32) {
    %c0_i32 = arith.constant 0 : i32
    %c0_i32_0 = arith.constant 0 : i32
    %c0_i32_1 = arith.constant 0 : i32
    return %c0_i32, %c0_i32_0 : i32, i32
  }
  func.func @transform_3(%arg0: i32) -> (i32, i32) {
    %c0_i32 = arith.constant 0 : i32
    %c0_i32_0 = arith.constant 0 : i32
    %c0_i32_1 = arith.constant 0 : i32
    return %c0_i32, %c0_i32_0 : i32, i32
  }
  func.func @transform_4(%arg0: i32) -> (i32, i32) {
    %c0_i32 = arith.constant 0 : i32
    %c0_i32_0 = arith.constant 0 : i32
    %c0_i32_1 = arith.constant 0 : i32
    return %c0_i32, %c0_i32_0 : i32, i32
  }
  func.func @transform_5(%arg0: i32) -> (i32, i32) {
    %c0_i32 = arith.constant 0 : i32
    %c0_i32_0 = arith.constant 0 : i32
    %c0_i32_1 = arith.constant 0 : i32
    return %c0_i32, %c0_i32_0 : i32, i32
  }
  func.func @transform_6(%arg0: i32) -> (i32, i32) {
    %c0_i32 = arith.constant 0 : i32
    %c0_i32_0 = arith.constant 0 : i32
    %c0_i32_1 = arith.constant 0 : i32
    return %c0_i32, %c0_i32_0 : i32, i32
  }
  func.func @transform_7(%arg0: i32) -> (i32, i32) {
    %c0_i32 = arith.constant 0 : i32
    %c0_i32_0 = arith.constant 0 : i32
    %c0_i32_1 = arith.constant 0 : i32
    return %c0_i32, %c0_i32_0 : i32, i32
  }
  func.func @transform_8(%arg0: i32) -> (i32, i32) {
    %c0_i32 = arith.constant 0 : i32
    %c0_i32_0 = arith.constant 0 : i32
    %c0_i32_1 = arith.constant 0 : i32
    return %c0_i32, %c0_i32_0 : i32, i32
  }
  func.func @transform_9(%arg0: i32) -> (i32, i32) {
    %c0_i32 = arith.constant 0 : i32
    %c0_i32_0 = arith.constant 0 : i32
    %c0_i32_1 = arith.constant 0 : i32
    return %c0_i32, %c0_i32_0 : i32, i32
  }
  func.func @transform_10(%arg0: i32) -> (i32, i32) {
    %c0_i32 = arith.constant 0 : i32
    %c0_i32_0 = arith.constant 0 : i32
    %c0_i32_1 = arith.constant 0 : i32
    return %c0_i32, %c0_i32_0 : i32, i32
  }
  func.func @transform_11(%arg0: i32) -> (i32, i32) {
    %c0_i32 = arith.constant 0 : i32
    %c0_i32_0 = arith.constant 0 : i32
    %c0_i32_1 = arith.constant 0 : i32
    return %c0_i32, %c0_i32_0 : i32, i32
  }
  func.func @transform_12(%arg0: i32) -> (i32, i32, i32) {
    %c0_i32 = arith.constant 0 : i32
    %c0_i32_0 = arith.constant 0 : i32
    %c0_i32_1 = arith.constant 0 : i32
    return %arg0, %c0_i32, %c0_i32_0 : i32, i32, i32
  }
}

</mosaic_0001>

<llo_original>
// kernel: block_forward.1
$region0: #{block_forward.1}
  #allocation0 [shape = 'u32[]', space=smem, size = 0x4, offset = 0x4, fixed_abs, tag = 'smem constant byte address 0x4 - core index']
  #allocation1 [shape = 'u32[144,128]{1,0:T(1,128)}', space=vmem, size = 0x12000, scoped, tag = 'internal scratch']
  %s0 = inlined_call_operand.vmem [shape: f32[2,8,128], index: 0, kind: input, shape index: {}]
  %s1 = inlined_call_operand.vmem [shape: f32[1,128], index: 1, kind: input, shape index: {}]
  %s2 = inlined_call_operand.vmem [shape: f32[1,128], index: 2, kind: input, shape index: {}]
  %s3 = inlined_call_operand.vmem [shape: bf16[128,384], index: 3, kind: input, shape index: {}]
  %s4 = inlined_call_operand.vmem [shape: bf16[128,128], index: 4, kind: input, shape index: {}]
  %s5 = inlined_call_operand.vmem [shape: f32[1,128], index: 5, kind: input, shape index: {}]
  %s6 = inlined_call_operand.vmem [shape: f32[1,128], index: 6, kind: input, shape index: {}]
  %s7 = inlined_call_operand.vmem [shape: f32[1,128], index: 7, kind: input, shape index: {}]
  %s8 = inlined_call_operand.vmem [shape: bf16[128,512], index: 8, kind: input, shape index: {}]
  %s9 = inlined_call_operand.vmem [shape: f32[1,512], index: 9, kind: input, shape index: {}]
  %s10 = inlined_call_operand.vmem [shape: bf16[512,128], index: 10, kind: input, shape index: {}]
  %s11 = inlined_call_operand.vmem [shape: f32[1,128], index: 11, kind: input, shape index: {}]
  %s12 = inlined_call_operand.hbm [shape: f32[2,8,128], index: 12, kind: output, shape index: {}]
  %s13 = sld [smem:[#allocation0]]
  $region81: #{block_forward.1} parent=0
    _
  %s15 = ssub.s32 1, %s13
  %s16 = scalar_select 0, %s15, %s13
  $region1: #{block_forward.1} parent=0
    #allocation2 [shape = 'u8[8192]{0}', space=vmem, size = 0x2000, scoped, tag = 'output window, operand 0']
    #allocation3 [shape = 's32[2]{0}', space=sflag, size = 0x8, scoped, tag = 'scoped memory for block_forward.1']
    %17 = vsyncpa [#allocation3], 0
    %s18 = scalar_lea.sflag [#allocation3], 1
    %19 = vsyncpa %s18, 0
    loop: start=0, step=1, limit=4
    $region2: #{block_forward.1} parent=1 // loop_pre_header
      _
    $region3: #{block_forward.1} parent=1 // loop_header
      %s21 = sphi 0, %s25
      %p22 = scmp.ge.s32.totalorder %s21, 4
      %s31 = sphi 0, %s33
      %s34 = sphi 0, %s31
      %s35 = sphi 0, %s34
      %s51 = sphi 0, %s35
      %s55 = sphi 0, %s55
      %s57 = sphi 0, %s55
      %s58 = sphi 0, %s57
      %s72 = sphi 0, %s58
      %s76 = sphi 0, %s76
      %s78 = sphi 0, %s76
      %s79 = sphi 0, %s78
      %s93 = sphi 0, %s79
      %s97 = sphi 0, %s97
      %s99 = sphi 0, %s97
      %s100 = sphi 0, %s99
      %s114 = sphi 0, %s100
      %s118 = sphi 0, %s118
      %s120 = sphi 0, %s118
      %s121 = sphi 0, %s120
      %s135 = sphi 0, %s121
      %s139 = sphi 0, %s139
      %s141 = sphi 0, %s139
      %s142 = sphi 0, %s141
      %s156 = sphi 0, %s142
      %s160 = sphi 0, %s160
      %s162 = sphi 0, %s160
      %s163 = sphi 0, %s162
      %s177 = sphi 0, %s163
      %s181 = sphi 0, %s181
      %s183 = sphi 0, %s181
      %s184 = sphi 0, %s183
      %s198 = sphi 0, %s184
      %s202 = sphi 0, %s202
      %s204 = sphi 0, %s202
      %s205 = sphi 0, %s204
      %s219 = sphi 0, %s205
      %s223 = sphi 0, %s223
      %s225 = sphi 0, %s223
      %s226 = sphi 0, %s225
      %s240 = sphi 0, %s226
      %s244 = sphi 0, %s244
      %s246 = sphi 0, %s244
      %s247 = sphi 0, %s246
      %s261 = sphi 0, %s247
      %s265 = sphi 0, %s265
      %s267 = sphi 0, %s265
      %s268 = sphi 0, %s267
      %s282 = sphi 0, %s268
      %s288 = sphi 0, %s290
      %s291 = sphi 0, %s288
      %s292 = sphi 0, %s291
      %s308 = sphi 0, %s292
    $region4: #{block_forward.1} parent=1 // loop_header_branch
      %24 = sbr.rel (%p22) target = $region8
    $region5: #{block_forward.1} parent=1 // loop_body
      %s26 = ssub.s32 %s21, 1
      %s27 = ssub.s32 %s21, 2
      %s28 = sadd.s32 %s21, 1
      %s29 = ssub.s32 %s21, %s28
      %p30 = scmp.eq.s32.totalorder %s29, 0
      %s32 = sadd.s32 %s31, 1
      %s33 = scalar_select %p30, %s31, %s32
      %p36 = pneg %p30
      %p37 = scmp.eq.s32.totalorder %s21, 1
      %p38 = por %p36, %p37
      %p39 = scmp.ne.s32.totalorder %s31, %s34
      %p40 = scmp.eq.s32.totalorder %s21, 0
      %p41 = por %p39, %p40
      %p42 = scmp.ne.s32.totalorder %s31, %s34
      %p43 = scmp.eq.s32.totalorder %s26, 1
      %p44 = por %p42, %p43
      %p45 = scmp.ne.s32.totalorder %s34, %s35
      %p46 = scmp.eq.s32.totalorder %s26, 0
      %p47 = por %p45, %p46
      %p48 = scmp.ne.s32.totalorder %s34, %s35
      %p49 = scmp.eq.s32.totalorder %s27, 1
      %p50 = por %p48, %p49
      %p52 = scmp.ne.s32.totalorder %s35, %s51
      %p53 = scmp.eq.s32.totalorder %s27, 0
      %p54 = por %p52, %p53
      %s56 = sadd.s32 %s55, 1
      %p59 = scmp.eq.s32.totalorder %s21, 1
      %p60 = scmp.ne.s32.totalorder %s55, %s57
      %p61 = scmp.eq.s32.totalorder %s21, 0
      %p62 = por %p60, %p61
      %p63 = scmp.ne.s32.totalorder %s55, %s57
      %p64 = scmp.eq.s32.totalorder %s26, 1
      %p65 = por %p63, %p64
      %p66 = scmp.ne.s32.totalorder %s57, %s58
      %p67 = scmp.eq.s32.totalorder %s26, 0
      %p68 = por %p66, %p67
      %p69 = scmp.ne.s32.totalorder %s57, %s58
      %p70 = scmp.eq.s32.totalorder %s27, 1
      %p71 = por %p69, %p70
      %p73 = scmp.ne.s32.totalorder %s58, %s72
      %p74 = scmp.eq.s32.totalorder %s27, 0
      %p75 = por %p73, %p74
      %s77 = sadd.s32 %s76, 1
      %p80 = scmp.eq.s32.totalorder %s21, 1
      %p81 = scmp.ne.s32.totalorder %s76, %s78
      %p82 = scmp.eq.s32.totalorder %s21, 0
      %p83 = por %p81, %p82
      %p84 = scmp.ne.s32.totalorder %s76, %s78
      %p85 = scmp.eq.s32.totalorder %s26, 1
      %p86 = por %p84, %p85
      %p87 = scmp.ne.s32.totalorder %s78, %s79
      %p88 = scmp.eq.s32.totalorder %s26, 0
      %p89 = por %p87, %p88
      %p90 = scmp.ne.s32.totalorder %s78, %s79
      %p91 = scmp.eq.s32.totalorder %s27, 1
      %p92 = por %p90, %p91
      %p94 = scmp.ne.s32.totalorder %s79, %s93
      %p95 = scmp.eq.s32.totalorder %s27, 0
      %p96 = por %p94, %p95
      %s98 = sadd.s32 %s97, 1
      %p101 = scmp.eq.s32.totalorder %s21, 1
      %p102 = scmp.ne.s32.totalorder %s97, %s99
      %p103 = scmp.eq.s32.totalorder %s21, 0
      %p104 = por %p102, %p103
      %p105 = scmp.ne.s32.totalorder %s97, %s99
      %p106 = scmp.eq.s32.totalorder %s26, 1
      %p107 = por %p105, %p106
      %p108 = scmp.ne.s32.totalorder %s99, %s100
      %p109 = scmp.eq.s32.totalorder %s26, 0
      %p110 = por %p108, %p109
      %p111 = scmp.ne.s32.totalorder %s99, %s100
      %p112 = scmp.eq.s32.totalorder %s27, 1
      %p113 = por %p111, %p112
      %p115 = scmp.ne.s32.totalorder %s100, %s114
      %p116 = scmp.eq.s32.totalorder %s27, 0
      %p117 = por %p115, %p116
      %s119 = sadd.s32 %s118, 1
      %p122 = scmp.eq.s32.totalorder %s21, 1
      %p123 = scmp.ne.s32.totalorder %s118, %s120
      %p124 = scmp.eq.s32.totalorder %s21, 0
      %p125 = por %p123, %p124
      %p126 = scmp.ne.s32.totalorder %s118, %s120
      %p127 = scmp.eq.s32.totalorder %s26, 1
      %p128 = por %p126, %p127
      %p129 = scmp.ne.s32.totalorder %s120, %s121
      %p130 = scmp.eq.s32.totalorder %s26, 0
      %p131 = por %p129, %p130
      %p132 = scmp.ne.s32.totalorder %s120, %s121
      %p133 = scmp.eq.s32.totalorder %s27, 1
      %p134 = por %p132, %p133
      %p136 = scmp.ne.s32.totalorder %s121, %s135
      %p137 = scmp.eq.s32.totalorder %s27, 0
      %p138 = por %p136, %p137
      %s140 = sadd.s32 %s139, 1
      %p143 = scmp.eq.s32.totalorder %s21, 1
      %p144 = scmp.ne.s32.totalorder %s139, %s141
      %p145 = scmp.eq.s32.totalorder %s21, 0
      %p146 = por %p144, %p145
      %p147 = scmp.ne.s32.totalorder %s139, %s141
      %p148 = scmp.eq.s32.totalorder %s26, 1
      %p149 = por %p147, %p148
      %p150 = scmp.ne.s32.totalorder %s141, %s142
      %p151 = scmp.eq.s32.totalorder %s26, 0
      %p152 = por %p150, %p151
      %p153 = scmp.ne.s32.totalorder %s141, %s142
      %p154 = scmp.eq.s32.totalorder %s27, 1
      %p155 = por %p153, %p154
      %p157 = scmp.ne.s32.totalorder %s142, %s156
      %p158 = scmp.eq.s32.totalorder %s27, 0
      %p159 = por %p157, %p158
      %s161 = sadd.s32 %s160, 1
      %p164 = scmp.eq.s32.totalorder %s21, 1
      %p165 = scmp.ne.s32.totalorder %s160, %s162
      %p166 = scmp.eq.s32.totalorder %s21, 0
      %p167 = por %p165, %p166
      %p168 = scmp.ne.s32.totalorder %s160, %s162
      %p169 = scmp.eq.s32.totalorder %s26, 1
      %p170 = por %p168, %p169
      %p171 = scmp.ne.s32.totalorder %s162, %s163
      %p172 = scmp.eq.s32.totalorder %s26, 0
      %p173 = por %p171, %p172
      %p174 = scmp.ne.s32.totalorder %s162, %s163
      %p175 = scmp.eq.s32.totalorder %s27, 1
      %p176 = por %p174, %p175
      %p178 = scmp.ne.s32.totalorder %s163, %s177
      %p179 = scmp.eq.s32.totalorder %s27, 0
      %p180 = por %p178, %p179
      %s182 = sadd.s32 %s181, 1
      %p185 = scmp.eq.s32.totalorder %s21, 1
      %p186 = scmp.ne.s32.totalorder %s181, %s183
      %p187 = scmp.eq.s32.totalorder %s21, 0
      %p188 = por %p186, %p187
      %p189 = scmp.ne.s32.totalorder %s181, %s183
      %p190 = scmp.eq.s32.totalorder %s26, 1
      %p191 = por %p189, %p190
      %p192 = scmp.ne.s32.totalorder %s183, %s184
      %p193 = scmp.eq.s32.totalorder %s26, 0
      %p194 = por %p192, %p193
      %p195 = scmp.ne.s32.totalorder %s183, %s184
      %p196 = scmp.eq.s32.totalorder %s27, 1
      %p197 = por %p195, %p196
      %p199 = scmp.ne.s32.totalorder %s184, %s198
      %p200 = scmp.eq.s32.totalorder %s27, 0
      %p201 = por %p199, %p200
      %s203 = sadd.s32 %s202, 1
      %p206 = scmp.eq.s32.totalorder %s21, 1
      %p207 = scmp.ne.s32.totalorder %s202, %s204
      %p208 = scmp.eq.s32.totalorder %s21, 0
      %p209 = por %p207, %p208
      %p210 = scmp.ne.s32.totalorder %s202, %s204
      %p211 = scmp.eq.s32.totalorder %s26, 1
      %p212 = por %p210, %p211
      %p213 = scmp.ne.s32.totalorder %s204, %s205
      %p214 = scmp.eq.s32.totalorder %s26, 0
      %p215 = por %p213, %p214
      %p216 = scmp.ne.s32.totalorder %s204, %s205
      %p217 = scmp.eq.s32.totalorder %s27, 1
      %p218 = por %p216, %p217
      %p220 = scmp.ne.s32.totalorder %s205, %s219
      %p221 = scmp.eq.s32.totalorder %s27, 0
      %p222 = por %p220, %p221
      %s224 = sadd.s32 %s223, 1
      %p227 = scmp.eq.s32.totalorder %s21, 1
      %p228 = scmp.ne.s32.totalorder %s223, %s225
      %p229 = scmp.eq.s32.totalorder %s21, 0
      %p230 = por %p228, %p229
      %p231 = scmp.ne.s32.totalorder %s223, %s225
      %p232 = scmp.eq.s32.totalorder %s26, 1
      %p233 = por %p231, %p232
      %p234 = scmp.ne.s32.totalorder %s225, %s226
      %p235 = scmp.eq.s32.totalorder %s26, 0
      %p236 = por %p234, %p235
      %p237 = scmp.ne.s32.totalorder %s225, %s226
      %p238 = scmp.eq.s32.totalorder %s27, 1
      %p239 = por %p237, %p238
      %p241 = scmp.ne.s32.totalorder %s226, %s240
      %p242 = scmp.eq.s32.totalorder %s27, 0
      %p243 = por %p241, %p242
      %s245 = sadd.s32 %s244, 1
      %p248 = scmp.eq.s32.totalorder %s21, 1
      %p249 = scmp.ne.s32.totalorder %s244, %s246
      %p250 = scmp.eq.s32.totalorder %s21, 0
      %p251 = por %p249, %p250
      %p252 = scmp.ne.s32.totalorder %s244, %s246
      %p253 = scmp.eq.s32.totalorder %s26, 1
      %p254 = por %p252, %p253
      %p255 = scmp.ne.s32.totalorder %s246, %s247
      %p256 = scmp.eq.s32.totalorder %s26, 0
      %p257 = por %p255, %p256
      %p258 = scmp.ne.s32.totalorder %s246, %s247
      %p259 = scmp.eq.s32.totalorder %s27, 1
      %p260 = por %p258, %p259
      %p262 = scmp.ne.s32.totalorder %s247, %s261
      %p263 = scmp.eq.s32.totalorder %s27, 0
      %p264 = por %p262, %p263
      %s266 = sadd.s32 %s265, 1
      %p269 = scmp.eq.s32.totalorder %s21, 1
      %p270 = scmp.ne.s32.totalorder %s265, %s267
      %p271 = scmp.eq.s32.totalorder %s21, 0
      %p272 = por %p270, %p271
      %p273 = scmp.ne.s32.totalorder %s265, %s267
      %p274 = scmp.eq.s32.totalorder %s26, 1
      %p275 = por %p273, %p274
      %p276 = scmp.ne.s32.totalorder %s267, %s268
      %p277 = scmp.eq.s32.totalorder %s26, 0
      %p278 = por %p276, %p277
      %p279 = scmp.ne.s32.totalorder %s267, %s268
      %p280 = scmp.eq.s32.totalorder %s27, 1
      %p281 = por %p279, %p280
      %p283 = scmp.ne.s32.totalorder %s268, %s282
      %p284 = scmp.eq.s32.totalorder %s27, 0
      %p285 = por %p283, %p284
      %s286 = ssub.s32 %s21, %s28
      %p287 = scmp.eq.s32.totalorder %s286, 0
      %s289 = sadd.s32 %s288, 1
      %s290 = scalar_select %p287, %s288, %s289
      %p293 = pneg %p287
      %p294 = scmp.eq.s32.totalorder %s21, 1
      %p295 = por %p293, %p294
      %p296 = scmp.ne.s32.totalorder %s288, %s291
      %p297 = scmp.eq.s32.totalorder %s21, 0
      %p298 = por %p296, %p297
      %p299 = scmp.ne.s32.totalorder %s288, %s291
      %p300 = scmp.eq.s32.totalorder %s26, 1
      %p301 = por %p299, %p300
      %p302 = scmp.ne.s32.totalorder %s291, %s292
      %p303 = scmp.eq.s32.totalorder %s26, 0
      %p304 = por %p302, %p303
      %p305 = scmp.ne.s32.totalorder %s291, %s292
      %p306 = scmp.eq.s32.totalorder %s27, 1
      %p307 = por %p305, %p306
      %p309 = scmp.ne.s32.totalorder %s292, %s308
      %p310 = scmp.eq.s32.totalorder %s27, 0
      %p311 = por %p309, %p310
      %p312 = scmp.le.s32.totalorder 1, %s21
      %p313 = scmp.lt.s32.totalorder %s21, 3
      %p314 = pnand %p312, %p313
      %p315 = pneg %p314
      // Predicated region
      $region9: #{block_forward.1} parent=5 // pred_check
        _
      $region10: #{block_forward.1} parent=5 // pred_check_branch
        %317 = sbr.rel (%p314) target = $region12
      $region11: #{block_forward.1} parent=5 // pred_region
        %s318 = ssub.s32 %s21, 1
        // Predicated region
        $region13: #{block_forward.1} parent=11 // pred_check
          %p319 = pneg %p68
        $region14: #{block_forward.1} parent=11 // pred_check_branch
          %321 = sbr.rel (%p319) target = $region16
        $region15: #{block_forward.1} parent=11 // pred_region
          _
        $region16: #{block_forward.1} parent=11 // pred_fallthru
          _
        // Predicated region
        $region17: #{block_forward.1} parent=11 // pred_check
          %p322 = pneg %p89
        $region18: #{block_forward.1} parent=11 // pred_check_branch
          %324 = sbr.rel (%p322) target = $region20
        $region19: #{block_forward.1} parent=11 // pred_region
          _
        $region20: #{block_forward.1} parent=11 // pred_fallthru
          _
        // Predicated region
        $region21: #{block_forward.1} parent=11 // pred_check
          %p325 = pneg %p110
        $region22: #{block_forward.1} parent=11 // pred_check_branch
          %327 = sbr.rel (%p325) target = $region24
        $region23: #{block_forward.1} parent=11 // pred_region
          _
        $region24: #{block_forward.1} parent=11 // pred_fallthru
          _
        // Predicated region
        $region25: #{block_forward.1} parent=11 // pred_check
          %p328 = pneg %p131
        $region26: #{block_forward.1} parent=11 // pred_check_branch
          %330 = sbr.rel (%p328) target = $region28
        $region27: #{block_forward.1} parent=11 // pred_region
          _
        $region28: #{block_forward.1} parent=11 // pred_fallthru
          _
        // Predicated region
        $region29: #{block_forward.1} parent=11 // pred_check
          %p331 = pneg %p152
        $region30: #{block_forward.1} parent=11 // pred_check_branch
          %333 = sbr.rel (%p331) target = $region32
        $region31: #{block_forward.1} parent=11 // pred_region
          _
        $region32: #{block_forward.1} parent=11 // pred_fallthru
          _
        // Predicated region
        $region33: #{block_forward.1} parent=11 // pred_check
          %p334 = pneg %p173
        $region34: #{block_forward.1} parent=11 // pred_check_branch
          %336 = sbr.rel (%p334) target = $region36
        $region35: #{block_forward.1} parent=11 // pred_region
          _
        $region36: #{block_forward.1} parent=11 // pred_fallthru
          _
        // Predicated region
        $region37: #{block_forward.1} parent=11 // pred_check
          %p337 = pneg %p194
        $region38: #{block_forward.1} parent=11 // pred_check_branch
          %339 = sbr.rel (%p337) target = $region40
        $region39: #{block_forward.1} parent=11 // pred_region
          _
        $region40: #{block_forward.1} parent=11 // pred_fallthru
          _
        // Predicated region
        $region41: #{block_forward.1} parent=11 // pred_check
          %p340 = pneg %p215
        $region42: #{block_forward.1} parent=11 // pred_check_branch
          %342 = sbr.rel (%p340) target = $region44
        $region43: #{block_forward.1} parent=11 // pred_region
          _
        $region44: #{block_forward.1} parent=11 // pred_fallthru
          _
        // Predicated region
        $region45: #{block_forward.1} parent=11 // pred_check
          %p343 = pneg %p236
        $region46: #{block_forward.1} parent=11 // pred_check_branch
          %345 = sbr.rel (%p343) target = $region48
        $region47: #{block_forward.1} parent=11 // pred_region
          _
        $region48: #{block_forward.1} parent=11 // pred_fallthru
          _
        // Predicated region
        $region49: #{block_forward.1} parent=11 // pred_check
          %p346 = pneg %p257
        $region50: #{block_forward.1} parent=11 // pred_check_branch
          %348 = sbr.rel (%p346) target = $region52
        $region51: #{block_forward.1} parent=11 // pred_region
          _
        $region52: #{block_forward.1} parent=11 // pred_fallthru
          _
        // Predicated region
        $region53: #{block_forward.1} parent=11 // pred_check
          %p349 = pneg %p278
        $region54: #{block_forward.1} parent=11 // pred_check_branch
          %351 = sbr.rel (%p349) target = $region56
        $region55: #{block_forward.1} parent=11 // pred_region
          _
        $region56: #{block_forward.1} parent=11 // pred_fallthru
          _
      $region12: #{block_forward.1} parent=5 // pred_fallthru
        _
      %p352 = scmp.lt.s32.totalorder %s21, 2
      // Predicated region
      $region57: #{block_forward.1} parent=5 // pred_check
        %p353 = pneg %p352
      $region58: #{block_forward.1} parent=5 // pred_check_branch
        %355 = sbr.rel (%p353) target = $region60
      $region59: #{block_forward.1} parent=5 // pred_region
        // Predicated region
        $region61: #{block_forward.1} parent=59 // pred_check
          %p356 = pneg %p41
        $region62: #{block_forward.1} parent=59 // pred_check_branch
          %358 = sbr.rel (%p356) target = $region64
        $region63: #{block_forward.1} parent=59 // pred_region
          %p359 = scmp.lt.s32.totalorder %s21, 1
          %s360 = scalar_select %p359, %s21, 1
          %s361 = smul.addr %s360, 8
          %s362 = scalar_lea.vmem %s0, %s361
        $region64: #{block_forward.1} parent=59 // pred_fallthru
          _
      $region60: #{block_forward.1} parent=5 // pred_fallthru
        _
      %p363 = scmp.le.s32.totalorder 1, %s21
      %p364 = scmp.lt.s32.totalorder %s21, 3
      %p365 = pnand %p363, %p364
      %p366 = pneg %p365
      // Predicated region
      $region65: #{block_forward.1} parent=5 // pred_check
        _
      $region66: #{block_forward.1} parent=5 // pred_check_branch
        %368 = sbr.rel (%p365) target = $region68
      $region67: #{block_forward.1} parent=5 // pred_region
        %s369 = ssub.s32 %s21, 1
        %p370 = scmp.lt.s32.totalorder %s26, 1
        %s371 = scalar_select %p370, %s26, 1
        %s372 = smul.addr %s371, 8
        %s373 = scalar_lea.vmem %s0, %s372
        %p374 = pneg %p47
        %p375 = pneg %p44
        %p376 = pneg %p68
        %p377 = pneg %p65
        %p378 = pneg %p89
        %p379 = pneg %p86
        %p380 = pneg %p110
        %p381 = pneg %p107
        %p382 = pneg %p131
        %p383 = pneg %p128
        %p384 = pneg %p152
        %p385 = pneg %p149
        %p386 = pneg %p173
        %p387 = pneg %p170
        %p388 = pneg %p194
        %p389 = pneg %p191
        %p390 = pneg %p215
        %p391 = pneg %p212
        %p392 = pneg %p236
        %p393 = pneg %p233
        %p394 = pneg %p257
        %p395 = pneg %p254
        %p396 = pneg %p278
        %p397 = pneg %p275
        %p398 = pneg %p304
        %p399 = pneg %p301
        %s400 = sand.u32 %s291, 1
        %s401 = scalar_lea.sflag [#allocation3], %s400
        %s402 = sand.u32 %s291, 1
        %s403 = smul.addr %s402, 8
        %s404 = scalar_lea.vmem [#allocation2], %s403
        %p405 = scmp.lt.s32.totalorder %s26, 1
        %s406 = scalar_select %p405, %s26, 1
        %s407 = smul.addr %s406, 8
        %s408 = scalar_lea.vmem %s0, %s407
        %v410 = vld [vmem:[%s408] sm:$0xff]
        %v411 = vld [vmem:[%s1] sm:$0x1]
        %v412 = vld [vmem:[%s2] sm:$0x1]
        %413 = vadd.xlane.f32.xlu0 %v410
        %v414 = vpop.xlane.xlu0 %413
        %v415 = vrcp.pop 128.0
        %v416 = vmul.f32 %v414, %v415
        %v417 = vsub.f32 %v410, %v416
        %v418 = vmul.f32 %v417, %v417
        %419 = vadd.xlane.f32.xlu0 %v418
        %v420 = vpop.xlane.xlu0 %419
        %v421 = vmul.f32 %v420, %v415
        %v422 = vadd.f32 %v421, 1e-05
        %v423 = vrsqrt.pop %v422
        %v424 = vmul.f32 %v417, %v423
        %v426 = vlaneseq
        %v427 = vshrl.u32 %v426, 7
        %v428 = vsub.s32 0, %v427
        %v429 = vrot.slane %v411, %v428
        %v431 = vmul.f32 %v424, %v429
        %v433 = vlaneseq
        %v434 = vshrl.u32 %v433, 7
        %v435 = vsub.s32 0, %v434
        %v436 = vrot.slane %v412, %v435
        %v438 = vadd.f32 %v431, %v436
        %v439 = vpack.c.bf16 %v438, %v438
        %v440 = vld [vmem:[%s3] sm:$0xff]
        %v441 = vld [vmem:[%s3 + $0x8] sm:$0xf]
        %v442 = vld [vmem:[%s3 + $0xc] sm:$0xff]
        %v443 = vld [vmem:[%s3 + $0x14] sm:$0xf]
        %v444 = vld [vmem:[%s3 + $0x18] sm:$0xff]
        %v445 = vld [vmem:[%s3 + $0x20] sm:$0xf]
        %v446 = vld [vmem:[%s3 + $0x24] sm:$0xff]
        %v447 = vld [vmem:[%s3 + $0x2c] sm:$0xf]
        %v448 = vld [vmem:[%s3 + $0x30] sm:$0xff]
        %v449 = vld [vmem:[%s3 + $0x38] sm:$0xf]
        %v450 = vld [vmem:[%s3 + $0x3c] sm:$0xff]
        %v451 = vld [vmem:[%s3 + $0x44] sm:$0xf]
        %v452 = vld [vmem:[%s3 + $0x48] sm:$0xff]
        %v453 = vld [vmem:[%s3 + $0x50] sm:$0xf]
        %v454 = vld [vmem:[%s3 + $0x54] sm:$0xff]
        %v455 = vld [vmem:[%s3 + $0x5c] sm:$0xf]
        %v456 = vld [vmem:[%s3 + $0x60] sm:$0xff]
        %v457 = vld [vmem:[%s3 + $0x68] sm:$0xf]
        %v458 = vld [vmem:[%s3 + $0x6c] sm:$0xff]
        %v459 = vld [vmem:[%s3 + $0x74] sm:$0xf]
        %v460 = vld [vmem:[%s3 + $0x78] sm:$0xff]
        %v461 = vld [vmem:[%s3 + $0x80] sm:$0xf]
        %v462 = vld [vmem:[%s3 + $0x84] sm:$0xff]
        %v463 = vld [vmem:[%s3 + $0x8c] sm:$0xf]
        %v464 = vld [vmem:[%s3 + $0x90] sm:$0xff]
        %v465 = vld [vmem:[%s3 + $0x98] sm:$0xf]
        %v466 = vld [vmem:[%s3 + $0x9c] sm:$0xff]
        %v467 = vld [vmem:[%s3 + $0xa4] sm:$0xf]
        %v468 = vld [vmem:[%s3 + $0xa8] sm:$0xff]
        %v469 = vld [vmem:[%s3 + $0xb0] sm:$0xf]
        %v470 = vld [vmem:[%s3 + $0xb4] sm:$0xff]
        %v471 = vld [vmem:[%s3 + $0xbc] sm:$0xf]
        %v504 = vunpack.c.l.b16 %v440
        %v505 = vunpack.c.h.b16 %v440
        %v506 = vunpack.c.l.b16 %v441
        %v507 = vunpack.c.l.b16 %v442
        %v508 = vunpack.c.h.b16 %v442
        %v509 = vunpack.c.l.b16 %v443
        %v510 = vunpack.c.l.b16 %v444
        %v511 = vunpack.c.h.b16 %v444
        %v512 = vunpack.c.l.b16 %v445
        %v513 = vunpack.c.l.b16 %v446
        %v514 = vunpack.c.h.b16 %v446
        %v515 = vunpack.c.l.b16 %v447
        %v516 = vunpack.c.l.b16 %v448
        %v517 = vunpack.c.h.b16 %v448
        %v518 = vunpack.c.l.b16 %v449
        %v519 = vunpack.c.l.b16 %v450
        %v520 = vunpack.c.h.b16 %v450
        %v521 = vunpack.c.l.b16 %v451
        %v522 = vunpack.c.l.b16 %v452
        %v523 = vunpack.c.h.b16 %v452
        %v524 = vunpack.c.l.b16 %v453
        %v525 = vunpack.c.l.b16 %v454
        %v526 = vunpack.c.h.b16 %v454
        %v527 = vunpack.c.l.b16 %v455
        %v528 = vunpack.c.l.b16 %v456
        %v529 = vunpack.c.h.b16 %v456
        %v530 = vunpack.c.l.b16 %v457
        %v531 = vunpack.c.l.b16 %v458
        %v532 = vunpack.c.h.b16 %v458
        %v533 = vunpack.c.l.b16 %v459
        %v534 = vunpack.c.l.b16 %v460
        %v535 = vunpack.c.h.b16 %v460
        %v536 = vunpack.c.l.b16 %v461
        %v537 = vunpack.c.l.b16 %v462
        %v538 = vunpack.c.h.b16 %v462
        %v539 = vunpack.c.l.b16 %v463
        %v540 = vunpack.c.l.b16 %v464
        %v541 = vunpack.c.h.b16 %v464
        %v542 = vunpack.c.l.b16 %v465
        %v543 = vunpack.c.l.b16 %v466
        %v544 = vunpack.c.h.b16 %v466
        %v545 = vunpack.c.l.b16 %v467
        %v546 = vunpack.c.l.b16 %v468
        %v547 = vunpack.c.h.b16 %v468
        %v548 = vunpack.c.l.b16 %v469
        %v549 = vunpack.c.l.b16 %v470
        %v550 = vunpack.c.h.b16 %v470
        %v551 = vunpack.c.l.b16 %v471
        %v552 = vpack.c.b16 %v507, %v504
        %v553 = vpack.c.b16 %v508, %v505
        %v554 = vpack.c.b16 %v509, %v506
        %v555 = vpack.c.b16 %v513, %v510
        %v556 = vpack.c.b16 %v514, %v511
        %v557 = vpack.c.b16 %v515, %v512
        %v558 = vpack.c.b16 %v519, %v516
        %v559 = vpack.c.b16 %v520, %v517
        %v560 = vpack.c.b16 %v521, %v518
        %v561 = vpack.c.b16 %v525, %v522
        %v562 = vpack.c.b16 %v526, %v523
        %v563 = vpack.c.b16 %v527, %v524
        %v564 = vpack.c.b16 %v531, %v528
        %v565 = vpack.c.b16 %v532, %v529
        %v566 = vpack.c.b16 %v533, %v530
        %v567 = vpack.c.b16 %v537, %v534
        %v568 = vpack.c.b16 %v538, %v535
        %v569 = vpack.c.b16 %v539, %v536
        %v570 = vpack.c.b16 %v543, %v540
        %v571 = vpack.c.b16 %v544, %v541
        %v572 = vpack.c.b16 %v545, %v542
        %v573 = vpack.c.b16 %v549, %v546
        %v574 = vpack.c.b16 %v550, %v547
        %v575 = vpack.c.b16 %v551, %v548
        %600 = vmatprep.subr.bf16.mxu0 %v553
        %601 = vmatpush1.bf16.msra.mxu0 %v552
        %602 = vmatprep.subr.bf16.mxu0 %v556
        %603 = vmatpush1.bf16.msra.mxu0 %v555
        %604 = vmatprep.subr.bf16.mxu0 %v559
        %605 = vmatpush1.bf16.msra.mxu0 %v558
        %606 = vmatprep.subr.bf16.mxu0 %v562
        %607 = vmatpush1.bf16.msra.mxu0 %v561
        %608 = vmatprep.subr.bf16.mxu0 %v565
        %609 = vmatpush1.bf16.msra.mxu0 %v564
        %610 = vmatprep.subr.bf16.mxu0 %v568
        %611 = vmatpush1.bf16.msra.mxu0 %v567
        %612 = vmatprep.subr.bf16.mxu0 %v571
        %613 = vmatpush1.bf16.msra.mxu0 %v570
        %614 = vmatprep.subr.bf16.mxu0 %v574
        %615 = vmatpush1.bf16.msra.mxu0 %v573
        %616 = vmatprep.subr.bf16.mxu0 0
        %617 = vmatpush1.bf16.msra.mxu0 0
        %618 = vmatprep.subr.bf16.mxu0 0
        %619 = vmatpush1.bf16.msra.mxu0 0
        %620 = vmatprep.subr.bf16.mxu0 0
        %621 = vmatpush1.bf16.msra.mxu0 0
        %622 = vmatprep.subr.bf16.mxu0 0
        %623 = vmatpush1.bf16.msra.mxu0 0
        %624 = vmatprep.subr.bf16.mxu0 0
        %625 = vmatpush1.bf16.msra.mxu0 0
        %626 = vmatprep.subr.bf16.mxu0 0
        %627 = vmatpush1.bf16.msra.mxu0 0
        %628 = vmatprep.subr.bf16.mxu0 0
        %629 = vmatpush1.bf16.msra.mxu0 0
        %630 = vmatprep.subr.bf16.mxu0 0
        %631 = vmatpush1.bf16.msra.mxu0 0
        %632 = vmatprep.mubr.bf16.mxu0 0
        %633 = vmatmul.mubr.bf16.gmra.mrb[0].mxu0 %v439
        %v634 = vpop.f32.mrb[0].mxu0
        %v635 = vadd.f32 0.0, %v634
        %v636 = vpop.f32.mrb[0].mxu0
        %v637 = vadd.f32 0.0, %v636
        %v638 = vpop.f32.mrb[0].mxu0
        %v639 = vpop.f32.mrb[0].mxu0
        %640 = vdwg.mxu0
        %641 = vmatprep.subr.bf16.mxu0 0
        %642 = vmatpush1.bf16.msra.mxu0 %v554
        %643 = vmatprep.subr.bf16.mxu0 0
        %644 = vmatpush1.bf16.msra.mxu0 %v557
        %645 = vmatprep.subr.bf16.mxu0 0
        %646 = vmatpush1.bf16.msra.mxu0 %v560
        %647 = vmatprep.subr.bf16.mxu0 0
        %648 = vmatpush1.bf16.msra.mxu0 %v563
        %649 = vmatprep.subr.bf16.mxu0 0
        %650 = vmatpush1.bf16.msra.mxu0 %v566
        %651 = vmatprep.subr.bf16.mxu0 0
        %652 = vmatpush1.bf16.msra.mxu0 %v569
        %653 = vmatprep.subr.bf16.mxu0 0
        %654 = vmatpush1.bf16.msra.mxu0 %v572
        %655 = vmatprep.subr.bf16.mxu0 0
        %656 = vmatpush1.bf16.msra.mxu0 %v575
        %657 = vmatprep.subr.bf16.mxu0 0
        %658 = vmatpush1.bf16.msra.mxu0 0
        %659 = vmatprep.subr.bf16.mxu0 0
        %660 = vmatpush1.bf16.msra.mxu0 0
        %661 = vmatprep.subr.bf16.mxu0 0
        %662 = vmatpush1.bf16.msra.mxu0 0
        %663 = vmatprep.subr.bf16.mxu0 0
        %664 = vmatpush1.bf16.msra.mxu0 0
        %665 = vmatprep.subr.bf16.mxu0 0
        %666 = vmatpush1.bf16.msra.mxu0 0
        %667 = vmatprep.subr.bf16.mxu0 0
        %668 = vmatpush1.bf16.msra.mxu0 0
        %669 = vmatprep.subr.bf16.mxu0 0
        %670 = vmatpush1.bf16.msra.mxu0 0
        %671 = vmatprep.subr.bf16.mxu0 0
        %672 = vmatpush1.bf16.msra.mxu0 0
        %673 = vmatprep.mubr.bf16.mxu0 0
        %674 = vmatmul.mubr.bf16.gmra.mrb[0].mxu0 %v439
        %v675 = vpop.f32.mrb[0].mxu0
        %v676 = vadd.f32 0.0, %v675
        %v677 = vpop.f32.mrb[0].mxu0
        %v678 = vpop.f32.mrb[0].mxu0
        %v679 = vpop.f32.mrb[0].mxu0
        %680 = vdwg.mxu0
        %v681 = vlaneseq
        %v682 = vshrl.u32 %v681, 7
        %v683 = vlaneseq
        %v684 = vand.u32 %v683, 127
        %vm685 = vcmp.le.s32.totalorder %v684, %v682
        %v686 = vpack.c.bf16 %v635, %v635
        %v687 = vpack.c.bf16 %v637, %v637
        %vm688 = vcmask 171008
        %v690 = vsel %vm688, %v686, 0
        %v693 = vsel %vm688, %v687, 0
        %695 = vmatprep.subr.bf16.mxu0 0
        %696 = vmatpush1.bf16.xpose.msra.mxu0 %v693
        %697 = vmatprep.subr.bf16.mxu0 0
        %698 = vmatpush1.bf16.xpose.msra.mxu0 0
        %699 = vmatprep.subr.bf16.mxu0 0
        %700 = vmatpush1.bf16.xpose.msra.mxu0 0
        %701 = vmatprep.subr.bf16.mxu0 0
        %702 = vmatpush1.bf16.xpose.msra.mxu0 0
        %703 = vmatprep.subr.bf16.mxu0 0
        %704 = vmatpush1.bf16.xpose.msra.mxu0 0
        %705 = vmatprep.subr.bf16.mxu0 0
        %706 = vmatpush1.bf16.xpose.msra.mxu0 0
        %707 = vmatprep.subr.bf16.mxu0 0
        %708 = vmatpush1.bf16.xpose.msra.mxu0 0
        %709 = vmatprep.subr.bf16.mxu0 0
        %710 = vmatpush1.bf16.xpose.msra.mxu0 0
        %711 = vmatprep.subr.bf16.mxu0 0
        %712 = vmatpush1.bf16.xpose.msra.mxu0 0
        %713 = vmatprep.subr.bf16.mxu0 0
        %714 = vmatpush1.bf16.xpose.msra.mxu0 0
        %715 = vmatprep.subr.bf16.mxu0 0
        %716 = vmatpush1.bf16.xpose.msra.mxu0 0
        %717 = vmatprep.subr.bf16.mxu0 0
        %718 = vmatpush1.bf16.xpose.msra.mxu0 0
        %719 = vmatprep.subr.bf16.mxu0 0
        %720 = vmatpush1.bf16.xpose.msra.mxu0 0
        %721 = vmatprep.subr.bf16.mxu0 0
        %722 = vmatpush1.bf16.xpose.msra.mxu0 0
        %723 = vmatprep.subr.bf16.mxu0 0
        %724 = vmatpush1.bf16.xpose.msra.mxu0 0
        %725 = vmatprep.subr.bf16.mxu0 0
        %726 = vmatpush1.bf16.xpose.msra.mxu0 0
        %727 = vmatprep.mubr.bf16.mxu0 0
        %728 = vmatmul.mubr.bf16.gmra.mrb[0].mxu0 %v690
        %v729 = vpop.f32.mrb[0].mxu0
        %v730 = vadd.f32 0.0, %v729
        %v731 = vpop.f32.mrb[0].mxu0
        %v732 = vpop.f32.mrb[0].mxu0
        %v733 = vpop.f32.mrb[0].mxu0
        %734 = vdwg.mxu0
        %v735 = vsel %vm685, %v730, -1e+30
        %vm736 = vcmask 64512
        %v737 = vsel %vm736, %v735, -inf
        %738 = vmax.xlane.f32.xlu0 %v737
        %v739 = vpop.xlane.xlu0 %738
        %v740 = vsub.f32 %v735, %v739
        %v741 = vmul.f32 %v740, 1.442695
        %v742 = vpow.pop %v741
        %v743 = vsel %vm736, %v742, 0.0
        %744 = vadd.xlane.f32.xlu0 %v743
        %v745 = vpop.xlane.xlu0 %744
        %v746 = vrcp.pop %v745
        %v747 = vmul.f32 %v742, %v746
        %v748 = vpack.c.bf16 %v747, %v747
        %v749 = vpack.c.bf16 %v676, %v676
        %v751 = vsel %vm736, %v748, 0
        %vm753 = vcmask 1043456
        %v755 = vsel %vm753, %v749, 0
        %757 = vmatprep.subr.bf16.mxu0 0
        %758 = vmatpush1.bf16.msra.mxu0 %v755
        %759 = vmatprep.subr.bf16.mxu0 0
        %760 = vmatpush1.bf16.msra.mxu0 0
        %761 = vmatprep.subr.bf16.mxu0 0
        %762 = vmatpush1.bf16.msra.mxu0 0
        %763 = vmatprep.subr.bf16.mxu0 0
        %764 = vmatpush1.bf16.msra.mxu0 0
        %765 = vmatprep.subr.bf16.mxu0 0
        %766 = vmatpush1.bf16.msra.mxu0 0
        %767 = vmatprep.subr.bf16.mxu0 0
        %768 = vmatpush1.bf16.msra.mxu0 0
        %769 = vmatprep.subr.bf16.mxu0 0
        %770 = vmatpush1.bf16.msra.mxu0 0
        %771 = vmatprep.subr.bf16.mxu0 0
        %772 = vmatpush1.bf16.msra.mxu0 0
        %773 = vmatprep.subr.bf16.mxu0 0
        %774 = vmatpush1.bf16.msra.mxu0 0
        %775 = vmatprep.subr.bf16.mxu0 0
        %776 = vmatpush1.bf16.msra.mxu0 0
        %777 = vmatprep.subr.bf16.mxu0 0
        %778 = vmatpush1.bf16.msra.mxu0 0
        %779 = vmatprep.subr.bf16.mxu0 0
        %780 = vmatpush1.bf16.msra.mxu0 0
        %781 = vmatprep.subr.bf16.mxu0 0
        %782 = vmatpush1.bf16.msra.mxu0 0
        %783 = vmatprep.subr.bf16.mxu0 0
        %784 = vmatpush1.bf16.msra.mxu0 0
        %785 = vmatprep.subr.bf16.mxu0 0
        %786 = vmatpush1.bf16.msra.mxu0 0
        %787 = vmatprep.subr.bf16.mxu0 0
        %788 = vmatpush1.bf16.msra.mxu0 0
        %789 = vmatprep.mubr.bf16.mxu0 0
        %790 = vmatmul.mubr.bf16.gmra.mrb[0].mxu0 %v751
        %v791 = vpop.f32.mrb[0].mxu0
        %v792 = vadd.f32 0.0, %v791
        %v793 = vpop.f32.mrb[0].mxu0
        %v794 = vpop.f32.mrb[0].mxu0
        %v795 = vpop.f32.mrb[0].mxu0
        %796 = vdwg.mxu0
        %798 = vrot.lane.b32.xlu0 %v686, 107
        %v799 = vpop.permute.xlu0 %798
        %801 = vrot.lane.b32.xlu0 %v687, 107
        %v802 = vpop.permute.xlu0 %801
        %v804 = vsel %vm688, %v799, 0
        %v807 = vsel %vm688, %v802, 0
        %809 = vmatprep.subr.bf16.mxu0 0
        %810 = vmatpush1.bf16.xpose.msra.mxu0 %v807
        %811 = vmatprep.subr.bf16.mxu0 0
        %812 = vmatpush1.bf16.xpose.msra.mxu0 0
        %813 = vmatprep.subr.bf16.mxu0 0
        %814 = vmatpush1.bf16.xpose.msra.mxu0 0
        %815 = vmatprep.subr.bf16.mxu0 0
        %816 = vmatpush1.bf16.xpose.msra.mxu0 0
        %817 = vmatprep.subr.bf16.mxu0 0
        %818 = vmatpush1.bf16.xpose.msra.mxu0 0
        %819 = vmatprep.subr.bf16.mxu0 0
        %820 = vmatpush1.bf16.xpose.msra.mxu0 0
        %821 = vmatprep.subr.bf16.mxu0 0
        %822 = vmatpush1.bf16.xpose.msra.mxu0 0
        %823 = vmatprep.subr.bf16.mxu0 0
        %824 = vmatpush1.bf16.xpose.msra.mxu0 0
        %825 = vmatprep.subr.bf16.mxu0 0
        %826 = vmatpush1.bf16.xpose.msra.mxu0 0
        %827 = vmatprep.subr.bf16.mxu0 0
        %828 = vmatpush1.bf16.xpose.msra.mxu0 0
        %829 = vmatprep.subr.bf16.mxu0 0
        %830 = vmatpush1.bf16.xpose.msra.mxu0 0
        %831 = vmatprep.subr.bf16.mxu0 0
        %832 = vmatpush1.bf16.xpose.msra.mxu0 0
        %833 = vmatprep.subr.bf16.mxu0 0
        %834 = vmatpush1.bf16.xpose.msra.mxu0 0
        %835 = vmatprep.subr.bf16.mxu0 0
        %836 = vmatpush1.bf16.xpose.msra.mxu0 0
        %837 = vmatprep.subr.bf16.mxu0 0
        %838 = vmatpush1.bf16.xpose.msra.mxu0 0
        %839 = vmatprep.subr.bf16.mxu0 0
        %840 = vmatpush1.bf16.xpose.msra.mxu0 0
        %841 = vmatprep.mubr.bf16.mxu0 0
        %842 = vmatmul.mubr.bf16.gmra.mrb[0].mxu0 %v804
        %v843 = vpop.f32.mrb[0].mxu0
        %v844 = vadd.f32 0.0, %v843
        %v845 = vpop.f32.mrb[0].mxu0
        %v846 = vpop.f32.mrb[0].mxu0
        %v847 = vpop.f32.mrb[0].mxu0
        %848 = vdwg.mxu0
        %v849 = vsel %vm685, %v844, -1e+30
        %v850 = vsel %vm736, %v849, -inf
        %851 = vmax.xlane.f32.xlu0 %v850
        %v852 = vpop.xlane.xlu0 %851
        %v853 = vsub.f32 %v849, %v852
        %v854 = vmul.f32 %v853, 1.442695
        %v855 = vpow.pop %v854
        %v856 = vsel %vm736, %v855, 0.0
        %857 = vadd.xlane.f32.xlu0 %v856
        %v858 = vpop.xlane.xlu0 %857
        %v859 = vrcp.pop %v858
        %v860 = vmul.f32 %v855, %v859
        %v861 = vpack.c.bf16 %v860, %v860
        %863 = vrot.lane.b32.xlu0 %v749, 107
        %v864 = vpop.permute.xlu0 %863
        %v866 = vsel %vm736, %v861, 0
        %v869 = vsel %vm753, %v864, 0
        %871 = vmatprep.subr.bf16.mxu0 0
        %872 = vmatpush1.bf16.msra.mxu0 %v869
        %873 = vmatprep.subr.bf16.mxu0 0
        %874 = vmatpush1.bf16.msra.mxu0 0
        %875 = vmatprep.subr.bf16.mxu0 0
        %876 = vmatpush1.bf16.msra.mxu0 0
        %877 = vmatprep.subr.bf16.mxu0 0
        %878 = vmatpush1.bf16.msra.mxu0 0
        %879 = vmatprep.subr.bf16.mxu0 0
        %880 = vmatpush1.bf16.msra.mxu0 0
        %881 = vmatprep.subr.bf16.mxu0 0
        %882 = vmatpush1.bf16.msra.mxu0 0
        %883 = vmatprep.subr.bf16.mxu0 0
        %884 = vmatpush1.bf16.msra.mxu0 0
        %885 = vmatprep.subr.bf16.mxu0 0
        %886 = vmatpush1.bf16.msra.mxu0 0
        %887 = vmatprep.subr.bf16.mxu0 0
        %888 = vmatpush1.bf16.msra.mxu0 0
        %889 = vmatprep.subr.bf16.mxu0 0
        %890 = vmatpush1.bf16.msra.mxu0 0
        %891 = vmatprep.subr.bf16.mxu0 0
        %892 = vmatpush1.bf16.msra.mxu0 0
        %893 = vmatprep.subr.bf16.mxu0 0
        %894 = vmatpush1.bf16.msra.mxu0 0
        %895 = vmatprep.subr.bf16.mxu0 0
        %896 = vmatpush1.bf16.msra.mxu0 0
        %897 = vmatprep.subr.bf16.mxu0 0
        %898 = vmatpush1.bf16.msra.mxu0 0
        %899 = vmatprep.subr.bf16.mxu0 0
        %900 = vmatpush1.bf16.msra.mxu0 0
        %901 = vmatprep.subr.bf16.mxu0 0
        %902 = vmatpush1.bf16.msra.mxu0 0
        %903 = vmatprep.mubr.bf16.mxu0 0
        %904 = vmatmul.mubr.bf16.gmra.mrb[0].mxu0 %v866
        %v905 = vpop.f32.mrb[0].mxu0
        %v906 = vadd.f32 0.0, %v905
        %v907 = vpop.f32.mrb[0].mxu0
        %v908 = vpop.f32.mrb[0].mxu0
        %v909 = vpop.f32.mrb[0].mxu0
        %910 = vdwg.mxu0
        %911 = vrot.lane.b32.xlu0 %v686, 86
        %v912 = vpop.permute.xlu0 %911
        %913 = vrot.lane.b32.xlu0 %v687, 86
        %v914 = vpop.permute.xlu0 %913
        %v916 = vsel %vm688, %v912, 0
        %v919 = vsel %vm688, %v914, 0
        %921 = vmatprep.subr.bf16.mxu0 0
        %922 = vmatpush1.bf16.xpose.msra.mxu0 %v919
        %923 = vmatprep.subr.bf16.mxu0 0
        %924 = vmatpush1.bf16.xpose.msra.mxu0 0
        %925 = vmatprep.subr.bf16.mxu0 0
        %926 = vmatpush1.bf16.xpose.msra.mxu0 0
        %927 = vmatprep.subr.bf16.mxu0 0
        %928 = vmatpush1.bf16.xpose.msra.mxu0 0
        %929 = vmatprep.subr.bf16.mxu0 0
        %930 = vmatpush1.bf16.xpose.msra.mxu0 0
        %931 = vmatprep.subr.bf16.mxu0 0
        %932 = vmatpush1.bf16.xpose.msra.mxu0 0
        %933 = vmatprep.subr.bf16.mxu0 0
        %934 = vmatpush1.bf16.xpose.msra.mxu0 0
        %935 = vmatprep.subr.bf16.mxu0 0
        %936 = vmatpush1.bf16.xpose.msra.mxu0 0
        %937 = vmatprep.subr.bf16.mxu0 0
        %938 = vmatpush1.bf16.xpose.msra.mxu0 0
        %939 = vmatprep.subr.bf16.mxu0 0
        %940 = vmatpush1.bf16.xpose.msra.mxu0 0
        %941 = vmatprep.subr.bf16.mxu0 0
        %942 = vmatpush1.bf16.xpose.msra.mxu0 0
        %943 = vmatprep.subr.bf16.mxu0 0
        %944 = vmatpush1.bf16.xpose.msra.mxu0 0
        %945 = vmatprep.subr.bf16.mxu0 0
        %946 = vmatpush1.bf16.xpose.msra.mxu0 0
        %947 = vmatprep.subr.bf16.mxu0 0
        %948 = vmatpush1.bf16.xpose.msra.mxu0 0
        %949 = vmatprep.subr.bf16.mxu0 0
        %950 = vmatpush1.bf16.xpose.msra.mxu0 0
        %951 = vmatprep.subr.bf16.mxu0 0
        %952 = vmatpush1.bf16.xpose.msra.mxu0 0
        %953 = vmatprep.mubr.bf16.mxu0 0
        %954 = vmatmul.mubr.bf16.gmra.mrb[0].mxu0 %v916
        %v955 = vpop.f32.mrb[0].mxu0
        %v956 = vadd.f32 0.0, %v955
        %v957 = vpop.f32.mrb[0].mxu0
        %v958 = vpop.f32.mrb[0].mxu0
        %v959 = vpop.f32.mrb[0].mxu0
        %960 = vdwg.mxu0
        %v961 = vsel %vm685, %v956, -1e+30
        %v962 = vsel %vm736, %v961, -inf
        %963 = vmax.xlane.f32.xlu0 %v962
        %v964 = vpop.xlane.xlu0 %963
        %v965 = vsub.f32 %v961, %v964
        %v966 = vmul.f32 %v965, 1.442695
        %v967 = vpow.pop %v966
        %v968 = vsel %vm736, %v967, 0.0
        %969 = vadd.xlane.f32.xlu0 %v968
        %v970 = vpop.xlane.xlu0 %969
        %v971 = vrcp.pop %v970
        %v972 = vmul.f32 %v967, %v971
        %v973 = vpack.c.bf16 %v972, %v972
        %974 = vrot.lane.b32.xlu0 %v749, 86
        %v975 = vpop.permute.xlu0 %974
        %v977 = vsel %vm736, %v973, 0
        %v980 = vsel %vm753, %v975, 0
        %982 = vmatprep.subr.bf16.mxu0 0
        %983 = vmatpush1.bf16.msra.mxu0 %v980
        %984 = vmatprep.subr.bf16.mxu0 0
        %985 = vmatpush1.bf16.msra.mxu0 0
        %986 = vmatprep.subr.bf16.mxu0 0
        %987 = vmatpush1.bf16.msra.mxu0 0
        %988 = vmatprep.subr.bf16.mxu0 0
        %989 = vmatpush1.bf16.msra.mxu0 0
        %990 = vmatprep.subr.bf16.mxu0 0
        %991 = vmatpush1.bf16.msra.mxu0 0
        %992 = vmatprep.subr.bf16.mxu0 0
        %993 = vmatpush1.bf16.msra.mxu0 0
        %994 = vmatprep.subr.bf16.mxu0 0
        %995 = vmatpush1.bf16.msra.mxu0 0
        %996 = vmatprep.subr.bf16.mxu0 0
        %997 = vmatpush1.bf16.msra.mxu0 0
        %998 = vmatprep.subr.bf16.mxu0 0
        %999 = vmatpush1.bf16.msra.mxu0 0
        %1000 = vmatprep.subr.bf16.mxu0 0
        %1001 = vmatpush1.bf16.msra.mxu0 0
        %1002 = vmatprep.subr.bf16.mxu0 0
        %1003 = vmatpush1.bf16.msra.mxu0 0
        %1004 = vmatprep.subr.bf16.mxu0 0
        %1005 = vmatpush1.bf16.msra.mxu0 0
        %1006 = vmatprep.subr.bf16.mxu0 0
        %1007 = vmatpush1.bf16.msra.mxu0 0
        %1008 = vmatprep.subr.bf16.mxu0 0
        %1009 = vmatpush1.bf16.msra.mxu0 0
        %1010 = vmatprep.subr.bf16.mxu0 0
        %1011 = vmatpush1.bf16.msra.mxu0 0
        %1012 = vmatprep.subr.bf16.mxu0 0
        %1013 = vmatpush1.bf16.msra.mxu0 0
        %1014 = vmatprep.mubr.bf16.mxu0 0
        %1015 = vmatmul.mubr.bf16.gmra.mrb[0].mxu0 %v977
        %v1016 = vpop.f32.mrb[0].mxu0
        %v1017 = vadd.f32 0.0, %v1016
        %v1018 = vpop.f32.mrb[0].mxu0
        %v1019 = vpop.f32.mrb[0].mxu0
        %v1020 = vpop.f32.mrb[0].mxu0
        %1021 = vdwg.mxu0
        %1022 = vrot.lane.b32.xlu0 %v686, 65
        %v1023 = vpop.permute.xlu0 %1022
        %1024 = vrot.lane.b32.xlu0 %v687, 65
        %v1025 = vpop.permute.xlu0 %1024
        %v1027 = vsel %vm688, %v1023, 0
        %v1030 = vsel %vm688, %v1025, 0
        %1032 = vmatprep.subr.bf16.mxu0 0
        %1033 = vmatpush1.bf16.xpose.msra.mxu0 %v1030
        %1034 = vmatprep.subr.bf16.mxu0 0
        %1035 = vmatpush1.bf16.xpose.msra.mxu0 0
        %1036 = vmatprep.subr.bf16.mxu0 0
        %1037 = vmatpush1.bf16.xpose.msra.mxu0 0
        %1038 = vmatprep.subr.bf16.mxu0 0
        %1039 = vmatpush1.bf16.xpose.msra.mxu0 0
        %1040 = vmatprep.subr.bf16.mxu0 0
        %1041 = vmatpush1.bf16.xpose.msra.mxu0 0
        %1042 = vmatprep.subr.bf16.mxu0 0
        %1043 = vmatpush1.bf16.xpose.msra.mxu0 0
        %1044 = vmatprep.subr.bf16.mxu0 0
        %1045 = vmatpush1.bf16.xpose.msra.mxu0 0
        %1046 = vmatprep.subr.bf16.mxu0 0
        %1047 = vmatpush1.bf16.xpose.msra.mxu0 0
        %1048 = vmatprep.subr.bf16.mxu0 0
        %1049 = vmatpush1.bf16.xpose.msra.mxu0 0
        %1050 = vmatprep.subr.bf16.mxu0 0
        %1051 = vmatpush1.bf16.xpose.msra.mxu0 0
        %1052 = vmatprep.subr.bf16.mxu0 0
        %1053 = vmatpush1.bf16.xpose.msra.mxu0 0
        %1054 = vmatprep.subr.bf16.mxu0 0
        %1055 = vmatpush1.bf16.xpose.msra.mxu0 0
        %1056 = vmatprep.subr.bf16.mxu0 0
        %1057 = vmatpush1.bf16.xpose.msra.mxu0 0
        %1058 = vmatprep.subr.bf16.mxu0 0
        %1059 = vmatpush1.bf16.xpose.msra.mxu0 0
        %1060 = vmatprep.subr.bf16.mxu0 0
        %1061 = vmatpush1.bf16.xpose.msra.mxu0 0
        %1062 = vmatprep.subr.bf16.mxu0 0
        %1063 = vmatpush1.bf16.xpose.msra.mxu0 0
        %1064 = vmatprep.mubr.bf16.mxu0 0
        %1065 = vmatmul.mubr.bf16.gmra.mrb[0].mxu0 %v1027
        %v1066 = vpop.f32.mrb[0].mxu0
        %v1067 = vadd.f32 0.0, %v1066
        %v1068 = vpop.f32.mrb[0].mxu0
        %v1069 = vpop.f32.mrb[0].mxu0
        %v1070 = vpop.f32.mrb[0].mxu0
        %1071 = vdwg.mxu0
        %v1072 = vsel %vm685, %v1067, -1e+30
        %v1073 = vsel %vm736, %v1072, -inf
        %1074 = vmax.xlane.f32.xlu0 %v1073
        %v1075 = vpop.xlane.xlu0 %1074
        %v1076 = vsub.f32 %v1072, %v1075
        %v1077 = vmul.f32 %v1076, 1.442695
        %v1078 = vpow.pop %v1077
        %v1079 = vsel %vm736, %v1078, 0.0
        %1080 = vadd.xlane.f32.xlu0 %v1079
        %v1081 = vpop.xlane.xlu0 %1080
        %v1082 = vrcp.pop %v1081
        %v1083 = vmul.f32 %v1078, %v1082
        %v1084 = vpack.c.bf16 %v1083, %v1083
        %1085 = vrot.lane.b32.xlu0 %v749, 65
        %v1086 = vpop.permute.xlu0 %1085
        %v1088 = vsel %vm736, %v1084, 0
        %v1091 = vsel %vm753, %v1086, 0
        %1093 = vmatprep.subr.bf16.mxu0 0
        %1094 = vmatpush1.bf16.msra.mxu0 %v1091
        %1095 = vmatprep.subr.bf16.mxu0 0
        %1096 = vmatpush1.bf16.msra.mxu0 0
        %1097 = vmatprep.subr.bf16.mxu0 0
        %1098 = vmatpush1.bf16.msra.mxu0 0
        %1099 = vmatprep.subr.bf16.mxu0 0
        %1100 = vmatpush1.bf16.msra.mxu0 0
        %1101 = vmatprep.subr.bf16.mxu0 0
        %1102 = vmatpush1.bf16.msra.mxu0 0
        %1103 = vmatprep.subr.bf16.mxu0 0
        %1104 = vmatpush1.bf16.msra.mxu0 0
        %1105 = vmatprep.subr.bf16.mxu0 0
        %1106 = vmatpush1.bf16.msra.mxu0 0
        %1107 = vmatprep.subr.bf16.mxu0 0
        %1108 = vmatpush1.bf16.msra.mxu0 0
        %1109 = vmatprep.subr.bf16.mxu0 0
        %1110 = vmatpush1.bf16.msra.mxu0 0
        %1111 = vmatprep.subr.bf16.mxu0 0
        %1112 = vmatpush1.bf16.msra.mxu0 0
        %1113 = vmatprep.subr.bf16.mxu0 0
        %1114 = vmatpush1.bf16.msra.mxu0 0
        %1115 = vmatprep.subr.bf16.mxu0 0
        %1116 = vmatpush1.bf16.msra.mxu0 0
        %1117 = vmatprep.subr.bf16.mxu0 0
        %1118 = vmatpush1.bf16.msra.mxu0 0
        %1119 = vmatprep.subr.bf16.mxu0 0
        %1120 = vmatpush1.bf16.msra.mxu0 0
        %1121 = vmatprep.subr.bf16.mxu0 0
        %1122 = vmatpush1.bf16.msra.mxu0 0
        %1123 = vmatprep.subr.bf16.mxu0 0
        %1124 = vmatpush1.bf16.msra.mxu0 0
        %1125 = vmatprep.mubr.bf16.mxu0 0
        %1126 = vmatmul.mubr.bf16.gmra.mrb[0].mxu0 %v1088
        %v1127 = vpop.f32.mrb[0].mxu0
        %v1128 = vadd.f32 0.0, %v1127
        %v1129 = vpop.f32.mrb[0].mxu0
        %v1130 = vpop.f32.mrb[0].mxu0
        %v1131 = vpop.f32.mrb[0].mxu0
        %1132 = vdwg.mxu0
        %1133 = vrot.lane.b32.xlu0 %v686, 44
        %v1134 = vpop.permute.xlu0 %1133
        %1135 = vrot.lane.b32.xlu0 %v687, 44
        %v1136 = vpop.permute.xlu0 %1135
        %v1138 = vsel %vm688, %v1134, 0
        %v1141 = vsel %vm688, %v1136, 0
        %1143 = vmatprep.subr.bf16.mxu0 0
        %1144 = vmatpush1.bf16.xpose.msra.mxu0 %v1141
        %1145 = vmatprep.subr.bf16.mxu0 0
        %1146 = vmatpush1.bf16.xpose.msra.mxu0 0
        %1147 = vmatprep.subr.bf16.mxu0 0
        %1148 = vmatpush1.bf16.xpose.msra.mxu0 0
        %1149 = vmatprep.subr.bf16.mxu0 0
        %1150 = vmatpush1.bf16.xpose.msra.mxu0 0
        %1151 = vmatprep.subr.bf16.mxu0 0
        %1152 = vmatpush1.bf16.xpose.msra.mxu0 0
        %1153 = vmatprep.subr.bf16.mxu0 0
        %1154 = vmatpush1.bf16.xpose.msra.mxu0 0
        %1155 = vmatprep.subr.bf16.mxu0 0
        %1156 = vmatpush1.bf16.xpose.msra.mxu0 0
        %1157 = vmatprep.subr.bf16.mxu0 0
        %1158 = vmatpush1.bf16.xpose.msra.mxu0 0
        %1159 = vmatprep.subr.bf16.mxu0 0
        %1160 = vmatpush1.bf16.xpose.msra.mxu0 0
        %1161 = vmatprep.subr.bf16.mxu0 0
        %1162 = vmatpush1.bf16.xpose.msra.mxu0 0
        %1163 = vmatprep.subr.bf16.mxu0 0
        %1164 = vmatpush1.bf16.xpose.msra.mxu0 0
        %1165 = vmatprep.subr.bf16.mxu0 0
        %1166 = vmatpush1.bf16.xpose.msra.mxu0 0
        %1167 = vmatprep.subr.bf16.mxu0 0
        %1168 = vmatpush1.bf16.xpose.msra.mxu0 0
        %1169 = vmatprep.subr.bf16.mxu0 0
        %1170 = vmatpush1.bf16.xpose.msra.mxu0 0
        %1171 = vmatprep.subr.bf16.mxu0 0
        %1172 = vmatpush1.bf16.xpose.msra.mxu0 0
        %1173 = vmatprep.subr.bf16.mxu0 0
        %1174 = vmatpush1.bf16.xpose.msra.mxu0 0
        %1175 = vmatprep.mubr.bf16.mxu0 0
        %1176 = vmatmul.mubr.bf16.gmra.mrb[0].mxu0 %v1138
        %v1177 = vpop.f32.mrb[0].mxu0
        %v1178 = vadd.f32 0.0, %v1177
        %v1179 = vpop.f32.mrb[0].mxu0
        %v1180 = vpop.f32.mrb[0].mxu0
        %v1181 = vpop.f32.mrb[0].mxu0
        %1182 = vdwg.mxu0
        %v1183 = vsel %vm685, %v1178, -1e+30
        %v1184 = vsel %vm736, %v1183, -inf
        %1185 = vmax.xlane.f32.xlu0 %v1184
        %v1186 = vpop.xlane.xlu0 %1185
        %v1187 = vsub.f32 %v1183, %v1186
        %v1188 = vmul.f32 %v1187, 1.442695
        %v1189 = vpow.pop %v1188
        %v1190 = vsel %vm736, %v1189, 0.0
        %1191 = vadd.xlane.f32.xlu0 %v1190
        %v1192 = vpop.xlane.xlu0 %1191
        %v1193 = vrcp.pop %v1192
        %v1194 = vmul.f32 %v1189, %v1193
        %v1195 = vpack.c.bf16 %v1194, %v1194
        %1196 = vrot.lane.b32.xlu0 %v749, 44
        %v1197 = vpop.permute.xlu0 %1196
        %v1199 = vsel %vm736, %v1195, 0
        %v1202 = vsel %vm753, %v1197, 0
        %1204 = vmatprep.subr.bf16.mxu0 0
        %1205 = vmatpush1.bf16.msra.mxu0 %v1202
        %1206 = vmatprep.subr.bf16.mxu0 0
        %1207 = vmatpush1.bf16.msra.mxu0 0
        %1208 = vmatprep.subr.bf16.mxu0 0
        %1209 = vmatpush1.bf16.msra.mxu0 0
        %1210 = vmatprep.subr.bf16.mxu0 0
        %1211 = vmatpush1.bf16.msra.mxu0 0
        %1212 = vmatprep.subr.bf16.mxu0 0
        %1213 = vmatpush1.bf16.msra.mxu0 0
        %1214 = vmatprep.subr.bf16.mxu0 0
        %1215 = vmatpush1.bf16.msra.mxu0 0
        %1216 = vmatprep.subr.bf16.mxu0 0
        %1217 = vmatpush1.bf16.msra.mxu0 0
        %1218 = vmatprep.subr.bf16.mxu0 0
        %1219 = vmatpush1.bf16.msra.mxu0 0
        %1220 = vmatprep.subr.bf16.mxu0 0
        %1221 = vmatpush1.bf16.msra.mxu0 0
        %1222 = vmatprep.subr.bf16.mxu0 0
        %1223 = vmatpush1.bf16.msra.mxu0 0
        %1224 = vmatprep.subr.bf16.mxu0 0
        %1225 = vmatpush1.bf16.msra.mxu0 0
        %1226 = vmatprep.subr.bf16.mxu0 0
        %1227 = vmatpush1.bf16.msra.mxu0 0
        %1228 = vmatprep.subr.bf16.mxu0 0
        %1229 = vmatpush1.bf16.msra.mxu0 0
        %1230 = vmatprep.subr.bf16.mxu0 0
        %1231 = vmatpush1.bf16.msra.mxu0 0
        %1232 = vmatprep.subr.bf16.mxu0 0
        %1233 = vmatpush1.bf16.msra.mxu0 0
        %1234 = vmatprep.subr.bf16.mxu0 0
        %1235 = vmatpush1.bf16.msra.mxu0 0
        %1236 = vmatprep.mubr.bf16.mxu0 0
        %1237 = vmatmul.mubr.bf16.gmra.mrb[0].mxu0 %v1199
        %v1238 = vpop.f32.mrb[0].mxu0
        %v1239 = vadd.f32 0.0, %v1238
        %v1240 = vpop.f32.mrb[0].mxu0
        %v1241 = vpop.f32.mrb[0].mxu0
        %v1242 = vpop.f32.mrb[0].mxu0
        %1243 = vdwg.mxu0
        %1244 = vrot.lane.b32.xlu0 %v686, 23
        %v1245 = vpop.permute.xlu0 %1244
        %1246 = vrot.lane.b32.xlu0 %v687, 23
        %v1247 = vpop.permute.xlu0 %1246
        %v1249 = vsel %vm688, %v1245, 0
        %v1252 = vsel %vm688, %v1247, 0
        %1254 = vmatprep.subr.bf16.mxu0 0
        %1255 = vmatpush1.bf16.xpose.msra.mxu0 %v1252
        %1256 = vmatprep.subr.bf16.mxu0 0
        %1257 = vmatpush1.bf16.xpose.msra.mxu0 0
        %1258 = vmatprep.subr.bf16.mxu0 0
        %1259 = vmatpush1.bf16.xpose.msra.mxu0 0
        %1260 = vmatprep.subr.bf16.mxu0 0
        %1261 = vmatpush1.bf16.xpose.msra.mxu0 0
        %1262 = vmatprep.subr.bf16.mxu0 0
        %1263 = vmatpush1.bf16.xpose.msra.mxu0 0
        %1264 = vmatprep.subr.bf16.mxu0 0
        %1265 = vmatpush1.bf16.xpose.msra.mxu0 0
        %1266 = vmatprep.subr.bf16.mxu0 0
        %1267 = vmatpush1.bf16.xpose.msra.mxu0 0
        %1268 = vmatprep.subr.bf16.mxu0 0
        %1269 = vmatpush1.bf16.xpose.msra.mxu0 0
        %1270 = vmatprep.subr.bf16.mxu0 0
        %1271 = vmatpush1.bf16.xpose.msra.mxu0 0
        %1272 = vmatprep.subr.bf16.mxu0 0
        %1273 = vmatpush1.bf16.xpose.msra.mxu0 0
        %1274 = vmatprep.subr.bf16.mxu0 0
        %1275 = vmatpush1.bf16.xpose.msra.mxu0 0
        %1276 = vmatprep.subr.bf16.mxu0 0
        %1277 = vmatpush1.bf16.xpose.msra.mxu0 0
        %1278 = vmatprep.subr.bf16.mxu0 0
        %1279 = vmatpush1.bf16.xpose.msra.mxu0 0
        %1280 = vmatprep.subr.bf16.mxu0 0
        %1281 = vmatpush1.bf16.xpose.msra.mxu0 0
        %1282 = vmatprep.subr.bf16.mxu0 0
        %1283 = vmatpush1.bf16.xpose.msra.mxu0 0
        %1284 = vmatprep.subr.bf16.mxu0 0
        %1285 = vmatpush1.bf16.xpose.msra.mxu0 0
        %1286 = vmatprep.mubr.bf16.mxu0 0
        %1287 = vmatmul.mubr.bf16.gmra.mrb[0].mxu0 %v1249
        %v1288 = vpop.f32.mrb[0].mxu0
        %v1289 = vadd.f32 0.0, %v1288
        %v1290 = vpop.f32.mrb[0].mxu0
        %v1291 = vpop.f32.mrb[0].mxu0
        %v1292 = vpop.f32.mrb[0].mxu0
        %1293 = vdwg.mxu0
        %v1294 = vsel %vm685, %v1289, -1e+30
        %v1295 = vsel %vm736, %v1294, -inf
        %1296 = vmax.xlane.f32.xlu0 %v1295
        %v1297 = vpop.xlane.xlu0 %1296
        %v1298 = vsub.f32 %v1294, %v1297
        %v1299 = vmul.f32 %v1298, 1.442695
        %v1300 = vpow.pop %v1299
        %v1301 = vsel %vm736, %v1300, 0.0
        %1302 = vadd.xlane.f32.xlu0 %v1301
        %v1303 = vpop.xlane.xlu0 %1302
        %v1304 = vrcp.pop %v1303
        %v1305 = vmul.f32 %v1300, %v1304
        %v1306 = vpack.c.bf16 %v1305, %v1305
        %1307 = vrot.lane.b32.xlu0 %v749, 23
        %v1308 = vpop.permute.xlu0 %1307
        %v1310 = vsel %vm736, %v1306, 0
        %v1313 = vsel %vm753, %v1308, 0
        %1315 = vmatprep.subr.bf16.mxu0 0
        %1316 = vmatpush1.bf16.msra.mxu0 %v1313
        %1317 = vmatprep.subr.bf16.mxu0 0
        %1318 = vmatpush1.bf16.msra.mxu0 0
        %1319 = vmatprep.subr.bf16.mxu0 0
        %1320 = vmatpush1.bf16.msra.mxu0 0
        %1321 = vmatprep.subr.bf16.mxu0 0
        %1322 = vmatpush1.bf16.msra.mxu0 0
        %1323 = vmatprep.subr.bf16.mxu0 0
        %1324 = vmatpush1.bf16.msra.mxu0 0
        %1325 = vmatprep.subr.bf16.mxu0 0
        %1326 = vmatpush1.bf16.msra.mxu0 0
        %1327 = vmatprep.subr.bf16.mxu0 0
        %1328 = vmatpush1.bf16.msra.mxu0 0
        %1329 = vmatprep.subr.bf16.mxu0 0
        %1330 = vmatpush1.bf16.msra.mxu0 0
        %1331 = vmatprep.subr.bf16.mxu0 0
        %1332 = vmatpush1.bf16.msra.mxu0 0
        %1333 = vmatprep.subr.bf16.mxu0 0
        %1334 = vmatpush1.bf16.msra.mxu0 0
        %1335 = vmatprep.subr.bf16.mxu0 0
        %1336 = vmatpush1.bf16.msra.mxu0 0
        %1337 = vmatprep.subr.bf16.mxu0 0
        %1338 = vmatpush1.bf16.msra.mxu0 0
        %1339 = vmatprep.subr.bf16.mxu0 0
        %1340 = vmatpush1.bf16.msra.mxu0 0
        %1341 = vmatprep.subr.bf16.mxu0 0
        %1342 = vmatpush1.bf16.msra.mxu0 0
        %1343 = vmatprep.subr.bf16.mxu0 0
        %1344 = vmatpush1.bf16.msra.mxu0 0
        %1345 = vmatprep.subr.bf16.mxu0 0
        %1346 = vmatpush1.bf16.msra.mxu0 0
        %1347 = vmatprep.mubr.bf16.mxu0 0
        %1348 = vmatmul.mubr.bf16.gmra.mrb[0].mxu0 %v1310
        %v1349 = vpop.f32.mrb[0].mxu0
        %v1350 = vadd.f32 0.0, %v1349
        %v1351 = vpop.f32.mrb[0].mxu0
        %v1352 = vpop.f32.mrb[0].mxu0
        %v1353 = vpop.f32.mrb[0].mxu0
        %1354 = vdwg.mxu0
        %1356 = vrot.lane.b32.xlu0 %v906, 21
        %v1357 = vpop.permute.xlu0 %1356
        %1360 = vrot.lane.b32.xlu0 %v1017, 42
        %v1361 = vpop.permute.xlu0 %1360
        %1364 = vrot.lane.b32.xlu0 %v1128, 63
        %v1365 = vpop.permute.xlu0 %1364
        %1368 = vrot.lane.b32.xlu0 %v1239, 84
        %v1369 = vpop.permute.xlu0 %1368
        %1372 = vrot.lane.b32.xlu0 %v1350, 105
        %v1373 = vpop.permute.xlu0 %1372
        %v1375 = vsel %vm688, %v792, %v1357
        %vm1376 = vcmask 343040
        %v1377 = vsel %vm1376, %v1375, %v1361
        %vm1378 = vcmask 515072
        %v1379 = vsel %vm1378, %v1377, %v1365
        %vm1380 = vcmask 687104
        %v1381 = vsel %vm1380, %v1379, %v1369
        %vm1382 = vcmask 859136
        %v1383 = vsel %vm1382, %v1381, %v1373
        %vm1384 = vcmask 1031168
        %v1385 = vsel %vm1384, %v1383, 0.0
        %v1386 = vpack.c.bf16 %v1385, %v1385
        %v1387 = vld [vmem:[%s4] sm:$0xf]
        %v1388 = vld [vmem:[%s4 + $0x4] sm:$0xf]
        %v1389 = vld [vmem:[%s4 + $0x8] sm:$0xf]
        %v1390 = vld [vmem:[%s4 + $0xc] sm:$0xf]
        %v1391 = vld [vmem:[%s4 + $0x10] sm:$0xf]
        %v1392 = vld [vmem:[%s4 + $0x14] sm:$0xf]
        %v1393 = vld [vmem:[%s4 + $0x18] sm:$0xf]
        %v1394 = vld [vmem:[%s4 + $0x1c] sm:$0xf]
        %v1395 = vld [vmem:[%s4 + $0x20] sm:$0xf]
        %v1396 = vld [vmem:[%s4 + $0x24] sm:$0xf]
        %v1397 = vld [vmem:[%s4 + $0x28] sm:$0xf]
        %v1398 = vld [vmem:[%s4 + $0x2c] sm:$0xf]
        %v1399 = vld [vmem:[%s4 + $0x30] sm:$0xf]
        %v1400 = vld [vmem:[%s4 + $0x34] sm:$0xf]
        %v1401 = vld [vmem:[%s4 + $0x38] sm:$0xf]
        %v1402 = vld [vmem:[%s4 + $0x3c] sm:$0xf]
        %v1403 = vld [vmem:[%s5] sm:$0x1]
        %v1405 = vlaneseq
        %v1406 = vshrl.u32 %v1405, 7
        %v1407 = vsub.s32 0, %v1406
        %v1408 = vrot.slane %v1403, %v1407
        %v1426 = vunpack.c.l.b16 %v1387
        %v1427 = vunpack.c.l.b16 %v1388
        %v1428 = vunpack.c.l.b16 %v1389
        %v1429 = vunpack.c.l.b16 %v1390
        %v1430 = vunpack.c.l.b16 %v1391
        %v1431 = vunpack.c.l.b16 %v1392
        %v1432 = vunpack.c.l.b16 %v1393
        %v1433 = vunpack.c.l.b16 %v1394
        %v1434 = vunpack.c.l.b16 %v1395
        %v1435 = vunpack.c.l.b16 %v1396
        %v1436 = vunpack.c.l.b16 %v1397
        %v1437 = vunpack.c.l.b16 %v1398
        %v1438 = vunpack.c.l.b16 %v1399
        %v1439 = vunpack.c.l.b16 %v1400
        %v1440 = vunpack.c.l.b16 %v1401
        %v1441 = vunpack.c.l.b16 %v1402
        %v1442 = vpack.c.b16 %v1427, %v1426
        %v1443 = vpack.c.b16 %v1429, %v1428
        %v1444 = vpack.c.b16 %v1431, %v1430
        %v1445 = vpack.c.b16 %v1433, %v1432
        %v1446 = vpack.c.b16 %v1435, %v1434
        %v1447 = vpack.c.b16 %v1437, %v1436
        %v1448 = vpack.c.b16 %v1439, %v1438
        %v1449 = vpack.c.b16 %v1441, %v1440
        %1458 = vmatprep.subr.bf16.mxu0 0
        %1459 = vmatpush1.bf16.msra.mxu0 %v1442
        %1460 = vmatprep.subr.bf16.mxu0 0
        %1461 = vmatpush1.bf16.msra.mxu0 %v1443
        %1462 = vmatprep.subr.bf16.mxu0 0
        %1463 = vmatpush1.bf16.msra.mxu0 %v1444
        %1464 = vmatprep.subr.bf16.mxu0 0
        %1465 = vmatpush1.bf16.msra.mxu0 %v1445
        %1466 = vmatprep.subr.bf16.mxu0 0
        %1467 = vmatpush1.bf16.msra.mxu0 %v1446
        %1468 = vmatprep.subr.bf16.mxu0 0
        %1469 = vmatpush1.bf16.msra.mxu0 %v1447
        %1470 = vmatprep.subr.bf16.mxu0 0
        %1471 = vmatpush1.bf16.msra.mxu0 %v1448
        %1472 = vmatprep.subr.bf16.mxu0 0
        %1473 = vmatpush1.bf16.msra.mxu0 %v1449
        %1474 = vmatprep.subr.bf16.mxu0 0
        %1475 = vmatpush1.bf16.msra.mxu0 0
        %1476 = vmatprep.subr.bf16.mxu0 0
        %1477 = vmatpush1.bf16.msra.mxu0 0
        %1478 = vmatprep.subr.bf16.mxu0 0
        %1479 = vmatpush1.bf16.msra.mxu0 0
        %1480 = vmatprep.subr.bf16.mxu0 0
        %1481 = vmatpush1.bf16.msra.mxu0 0
        %1482 = vmatprep.subr.bf16.mxu0 0
        %1483 = vmatpush1.bf16.msra.mxu0 0
        %1484 = vmatprep.subr.bf16.mxu0 0
        %1485 = vmatpush1.bf16.msra.mxu0 0
        %1486 = vmatprep.subr.bf16.mxu0 0
        %1487 = vmatpush1.bf16.msra.mxu0 0
        %1488 = vmatprep.subr.bf16.mxu0 0
        %1489 = vmatpush1.bf16.msra.mxu0 0
        %1490 = vmatprep.mubr.bf16.mxu0 0
        %1491 = vmatmul.mubr.bf16.gmra.mrb[0].mxu0 %v1386
        %v1492 = vpop.f32.mrb[0].mxu0
        %v1493 = vadd.f32 %v1408, %v1492
        %v1494 = vpop.f32.mrb[0].mxu0
        %v1495 = vpop.f32.mrb[0].mxu0
        %v1496 = vpop.f32.mrb[0].mxu0
        %1497 = vdwg.mxu0
        %v1498 = vadd.f32 %v410, %v1493
        %v1499 = vld [vmem:[%s6] sm:$0x1]
        %v1500 = vld [vmem:[%s7] sm:$0x1]
        %1501 = vadd.xlane.f32.xlu0 %v1498
        %v1502 = vpop.xlane.xlu0 %1501
        %v1503 = vmul.f32 %v1502, %v415
        %v1504 = vsub.f32 %v1498, %v1503
        %v1505 = vmul.f32 %v1504, %v1504
        %1506 = vadd.xlane.f32.xlu0 %v1505
        %v1507 = vpop.xlane.xlu0 %1506
        %v1508 = vmul.f32 %v1507, %v415
        %v1509 = vadd.f32 %v1508, 1e-05
        %v1510 = vrsqrt.pop %v1509
        %v1511 = vmul.f32 %v1504, %v1510
        %v1513 = vlaneseq
        %v1514 = vshrl.u32 %v1513, 7
        %v1515 = vsub.s32 0, %v1514
        %v1516 = vrot.slane %v1499, %v1515
        %v1518 = vmul.f32 %v1511, %v1516
        %v1520 = vlaneseq
        %v1521 = vshrl.u32 %v1520, 7
        %v1522 = vsub.s32 0, %v1521
        %v1523 = vrot.slane %v1500, %v1522
        %v1525 = vadd.f32 %v1518, %v1523
        %v1526 = vpack.c.bf16 %v1525, %v1525
        %v1527 = vld [vmem:[%s8] sm:$0xff]
        %v1528 = vld [vmem:[%s8 + $0x8] sm:$0xff]
        %v1529 = vld [vmem:[%s8 + $0x10] sm:$0xff]
        %v1530 = vld [vmem:[%s8 + $0x18] sm:$0xff]
        %v1531 = vld [vmem:[%s8 + $0x20] sm:$0xff]
        %v1532 = vld [vmem:[%s8 + $0x28] sm:$0xff]
        %v1533 = vld [vmem:[%s8 + $0x30] sm:$0xff]
        %v1534 = vld [vmem:[%s8 + $0x38] sm:$0xff]
        %v1535 = vld [vmem:[%s8 + $0x40] sm:$0xff]
        %v1536 = vld [vmem:[%s8 + $0x48] sm:$0xff]
        %v1537 = vld [vmem:[%s8 + $0x50] sm:$0xff]
        %v1538 = vld [vmem:[%s8 + $0x58] sm:$0xff]
        %v1539 = vld [vmem:[%s8 + $0x60] sm:$0xff]
        %v1540 = vld [vmem:[%s8 + $0x68] sm:$0xff]
        %v1541 = vld [vmem:[%s8 + $0x70] sm:$0xff]
        %v1542 = vld [vmem:[%s8 + $0x78] sm:$0xff]
        %v1543 = vld [vmem:[%s8 + $0x80] sm:$0xff]
        %v1544 = vld [vmem:[%s8 + $0x88] sm:$0xff]
        %v1545 = vld [vmem:[%s8 + $0x90] sm:$0xff]
        %v1546 = vld [vmem:[%s8 + $0x98] sm:$0xff]
        %v1547 = vld [vmem:[%s8 + $0xa0] sm:$0xff]
        %v1548 = vld [vmem:[%s8 + $0xa8] sm:$0xff]
        %v1549 = vld [vmem:[%s8 + $0xb0] sm:$0xff]
        %v1550 = vld [vmem:[%s8 + $0xb8] sm:$0xff]
        %v1551 = vld [vmem:[%s8 + $0xc0] sm:$0xff]
        %v1552 = vld [vmem:[%s8 + $0xc8] sm:$0xff]
        %v1553 = vld [vmem:[%s8 + $0xd0] sm:$0xff]
        %v1554 = vld [vmem:[%s8 + $0xd8] sm:$0xff]
        %v1555 = vld [vmem:[%s8 + $0xe0] sm:$0xff]
        %v1556 = vld [vmem:[%s8 + $0xe8] sm:$0xff]
        %v1557 = vld [vmem:[%s8 + $0xf0] sm:$0xff]
        %v1558 = vld [vmem:[%s8 + $0xf8] sm:$0xff]
        %v1559 = vld [vmem:[%s9] sm:$0xf]
        %v1561 = vlaneseq
        %v1562 = vshrl.u32 %v1561, 7
        %v1563 = vsub.s32 0, %v1562
        %v1564 = vrot.slane %v1559, %v1563
        %v1565 = vlaneseq
        %v1566 = vshrl.u32 %v1565, 7
        %v1567 = vsub.s32 1, %v1566
        %v1568 = vrot.slane %v1559, %v1567
        %v1569 = vlaneseq
        %v1570 = vshrl.u32 %v1569, 7
        %v1571 = vsub.s32 2, %v1570
        %v1572 = vrot.slane %v1559, %v1571
        %v1573 = vlaneseq
        %v1574 = vshrl.u32 %v1573, 7
        %v1575 = vsub.s32 3, %v1574
        %v1576 = vrot.slane %v1559, %v1575
        %v1613 = vunpack.c.l.b16 %v1527
        %v1614 = vunpack.c.h.b16 %v1527
        %v1615 = vunpack.c.l.b16 %v1528
        %v1616 = vunpack.c.h.b16 %v1528
        %v1617 = vunpack.c.l.b16 %v1529
        %v1618 = vunpack.c.h.b16 %v1529
        %v1619 = vunpack.c.l.b16 %v1530
        %v1620 = vunpack.c.h.b16 %v1530
        %v1621 = vunpack.c.l.b16 %v1531
        %v1622 = vunpack.c.h.b16 %v1531
        %v1623 = vunpack.c.l.b16 %v1532
        %v1624 = vunpack.c.h.b16 %v1532
        %v1625 = vunpack.c.l.b16 %v1533
        %v1626 = vunpack.c.h.b16 %v1533
        %v1627 = vunpack.c.l.b16 %v1534
        %v1628 = vunpack.c.h.b16 %v1534
        %v1629 = vunpack.c.l.b16 %v1535
        %v1630 = vunpack.c.h.b16 %v1535
        %v1631 = vunpack.c.l.b16 %v1536
        %v1632 = vunpack.c.h.b16 %v1536
        %v1633 = vunpack.c.l.b16 %v1537
        %v1634 = vunpack.c.h.b16 %v1537
        %v1635 = vunpack.c.l.b16 %v1538
        %v1636 = vunpack.c.h.b16 %v1538
        %v1637 = vunpack.c.l.b16 %v1539
        %v1638 = vunpack.c.h.b16 %v1539
        %v1639 = vunpack.c.l.b16 %v1540
        %v1640 = vunpack.c.h.b16 %v1540
        %v1641 = vunpack.c.l.b16 %v1541
        %v1642 = vunpack.c.h.b16 %v1541
        %v1643 = vunpack.c.l.b16 %v1542
        %v1644 = vunpack.c.h.b16 %v1542
        %v1645 = vunpack.c.l.b16 %v1543
        %v1646 = vunpack.c.h.b16 %v1543
        %v1647 = vunpack.c.l.b16 %v1544
        %v1648 = vunpack.c.h.b16 %v1544
        %v1649 = vunpack.c.l.b16 %v1545
        %v1650 = vunpack.c.h.b16 %v1545
        %v1651 = vunpack.c.l.b16 %v1546
        %v1652 = vunpack.c.h.b16 %v1546
        %v1653 = vunpack.c.l.b16 %v1547
        %v1654 = vunpack.c.h.b16 %v1547
        %v1655 = vunpack.c.l.b16 %v1548
        %v1656 = vunpack.c.h.b16 %v1548
        %v1657 = vunpack.c.l.b16 %v1549
        %v1658 = vunpack.c.h.b16 %v1549
        %v1659 = vunpack.c.l.b16 %v1550
        %v1660 = vunpack.c.h.b16 %v1550
        %v1661 = vunpack.c.l.b16 %v1551
        %v1662 = vunpack.c.h.b16 %v1551
        %v1663 = vunpack.c.l.b16 %v1552
        %v1664 = vunpack.c.h.b16 %v1552
        %v1665 = vunpack.c.l.b16 %v1553
        %v1666 = vunpack.c.h.b16 %v1553
        %v1667 = vunpack.c.l.b16 %v1554
        %v1668 = vunpack.c.h.b16 %v1554
        %v1669 = vunpack.c.l.b16 %v1555
        %v1670 = vunpack.c.h.b16 %v1555
        %v1671 = vunpack.c.l.b16 %v1556
        %v1672 = vunpack.c.h.b16 %v1556
        %v1673 = vunpack.c.l.b16 %v1557
        %v1674 = vunpack.c.h.b16 %v1557
        %v1675 = vunpack.c.l.b16 %v1558
        %v1676 = vunpack.c.h.b16 %v1558
        %v1677 = vpack.c.b16 %v1617, %v1613
        %v1678 = vpack.c.b16 %v1618, %v1614
        %v1679 = vpack.c.b16 %v1619, %v1615
        %v1680 = vpack.c.b16 %v1620, %v1616
        %v1681 = vpack.c.b16 %v1625, %v1621
        %v1682 = vpack.c.b16 %v1626, %v1622
        %v1683 = vpack.c.b16 %v1627, %v1623
        %v1684 = vpack.c.b16 %v1628, %v1624
        %v1685 = vpack.c.b16 %v1633, %v1629
        %v1686 = vpack.c.b16 %v1634, %v1630
        %v1687 = vpack.c.b16 %v1635, %v1631
        %v1688 = vpack.c.b16 %v1636, %v1632
        %v1689 = vpack.c.b16 %v1641, %v1637
        %v1690 = vpack.c.b16 %v1642, %v1638
        %v1691 = vpack.c.b16 %v1643, %v1639
        %v1692 = vpack.c.b16 %v1644, %v1640
        %v1693 = vpack.c.b16 %v1649, %v1645
        %v1694 = vpack.c.b16 %v1650, %v1646
        %v1695 = vpack.c.b16 %v1651, %v1647
        %v1696 = vpack.c.b16 %v1652, %v1648
        %v1697 = vpack.c.b16 %v1657, %v1653
        %v1698 = vpack.c.b16 %v1658, %v1654
        %v1699 = vpack.c.b16 %v1659, %v1655
        %v1700 = vpack.c.b16 %v1660, %v1656
        %v1701 = vpack.c.b16 %v1665, %v1661
        %v1702 = vpack.c.b16 %v1666, %v1662
        %v1703 = vpack.c.b16 %v1667, %v1663
        %v1704 = vpack.c.b16 %v1668, %v1664
        %v1705 = vpack.c.b16 %v1673, %v1669
        %v1706 = vpack.c.b16 %v1674, %v1670
        %v1707 = vpack.c.b16 %v1675, %v1671
        %v1708 = vpack.c.b16 %v1676, %v1672
        %1741 = vmatprep.subr.bf16.mxu0 %v1678
        %1742 = vmatpush1.bf16.msra.mxu0 %v1677
        %1743 = vmatprep.subr.bf16.mxu0 %v1682
        %1744 = vmatpush1.bf16.msra.mxu0 %v1681
        %1745 = vmatprep.subr.bf16.mxu0 %v1686
        %1746 = vmatpush1.bf16.msra.mxu0 %v1685
        %1747 = vmatprep.subr.bf16.mxu0 %v1690
        %1748 = vmatpush1.bf16.msra.mxu0 %v1689
        %1749 = vmatprep.subr.bf16.mxu0 %v1694
        %1750 = vmatpush1.bf16.msra.mxu0 %v1693
        %1751 = vmatprep.subr.bf16.mxu0 %v1698
        %1752 = vmatpush1.bf16.msra.mxu0 %v1697
        %1753 = vmatprep.subr.bf16.mxu0 %v1702
        %1754 = vmatpush1.bf16.msra.mxu0 %v1701
        %1755 = vmatprep.subr.bf16.mxu0 %v1706
        %1756 = vmatpush1.bf16.msra.mxu0 %v1705
        %1757 = vmatprep.subr.bf16.mxu0 0
        %1758 = vmatpush1.bf16.msra.mxu0 0
        %1759 = vmatprep.subr.bf16.mxu0 0
        %1760 = vmatpush1.bf16.msra.mxu0 0
        %1761 = vmatprep.subr.bf16.mxu0 0
        %1762 = vmatpush1.bf16.msra.mxu0 0
        %1763 = vmatprep.subr.bf16.mxu0 0
        %1764 = vmatpush1.bf16.msra.mxu0 0
        %1765 = vmatprep.subr.bf16.mxu0 0
        %1766 = vmatpush1.bf16.msra.mxu0 0
        %1767 = vmatprep.subr.bf16.mxu0 0
        %1768 = vmatpush1.bf16.msra.mxu0 0
        %1769 = vmatprep.subr.bf16.mxu0 0
        %1770 = vmatpush1.bf16.msra.mxu0 0
        %1771 = vmatprep.subr.bf16.mxu0 0
        %1772 = vmatpush1.bf16.msra.mxu0 0
        %1773 = vmatprep.mubr.bf16.mxu0 0
        %1774 = vmatmul.mubr.bf16.gmra.mrb[0].mxu0 %v1526
        %v1775 = vpop.f32.mrb[0].mxu0
        %v1776 = vadd.f32 %v1564, %v1775
        %v1777 = vpop.f32.mrb[0].mxu0
        %v1778 = vadd.f32 %v1568, %v1777
        %v1779 = vpop.f32.mrb[0].mxu0
        %v1780 = vpop.f32.mrb[0].mxu0
        %1781 = vdwg.mxu0
        %1782 = vmatprep.subr.bf16.mxu0 %v1680
        %1783 = vmatpush1.bf16.msra.mxu0 %v1679
        %1784 = vmatprep.subr.bf16.mxu0 %v1684
        %1785 = vmatpush1.bf16.msra.mxu0 %v1683
        %1786 = vmatprep.subr.bf16.mxu0 %v1688
        %1787 = vmatpush1.bf16.msra.mxu0 %v1687
        %1788 = vmatprep.subr.bf16.mxu0 %v1692
        %1789 = vmatpush1.bf16.msra.mxu0 %v1691
        %1790 = vmatprep.subr.bf16.mxu0 %v1696
        %1791 = vmatpush1.bf16.msra.mxu0 %v1695
        %1792 = vmatprep.subr.bf16.mxu0 %v1700
        %1793 = vmatpush1.bf16.msra.mxu0 %v1699
        %1794 = vmatprep.subr.bf16.mxu0 %v1704
        %1795 = vmatpush1.bf16.msra.mxu0 %v1703
        %1796 = vmatprep.subr.bf16.mxu0 %v1708
        %1797 = vmatpush1.bf16.msra.mxu0 %v1707
        %1798 = vmatprep.subr.bf16.mxu0 0
        %1799 = vmatpush1.bf16.msra.mxu0 0
        %1800 = vmatprep.subr.bf16.mxu0 0
        %1801 = vmatpush1.bf16.msra.mxu0 0
        %1802 = vmatprep.subr.bf16.mxu0 0
        %1803 = vmatpush1.bf16.msra.mxu0 0
        %1804 = vmatprep.subr.bf16.mxu0 0
        %1805 = vmatpush1.bf16.msra.mxu0 0
        %1806 = vmatprep.subr.bf16.mxu0 0
        %1807 = vmatpush1.bf16.msra.mxu0 0
        %1808 = vmatprep.subr.bf16.mxu0 0
        %1809 = vmatpush1.bf16.msra.mxu0 0
        %1810 = vmatprep.subr.bf16.mxu0 0
        %1811 = vmatpush1.bf16.msra.mxu0 0
        %1812 = vmatprep.subr.bf16.mxu0 0
        %1813 = vmatpush1.bf16.msra.mxu0 0
        %1814 = vmatprep.mubr.bf16.mxu0 0
        %1815 = vmatmul.mubr.bf16.gmra.mrb[0].mxu0 %v1526
        %v1816 = vpop.f32.mrb[0].mxu0
        %v1817 = vadd.f32 %v1572, %v1816
        %v1818 = vpop.f32.mrb[0].mxu0
        %v1819 = vadd.f32 %v1576, %v1818
        %v1820 = vpop.f32.mrb[0].mxu0
        %v1821 = vpop.f32.mrb[0].mxu0
        %1822 = vdwg.mxu0
        %v1823 = vmax.f32 %v1776, 0.0
        %v1824 = vmax.f32 %v1778, 0.0
        %v1825 = vmax.f32 %v1817, 0.0
        %v1826 = vmax.f32 %v1819, 0.0
        %v1827 = vpack.c.bf16 %v1823, %v1823
        %v1828 = vpack.c.bf16 %v1824, %v1824
        %v1829 = vpack.c.bf16 %v1825, %v1825
        %v1830 = vpack.c.bf16 %v1826, %v1826
        %v1831 = vld [vmem:[%s10] sm:$0xf]
        %v1832 = vld [vmem:[%s10 + $0x4] sm:$0xf]
        %v1833 = vld [vmem:[%s10 + $0x8] sm:$0xf]
        %v1834 = vld [vmem:[%s10 + $0xc] sm:$0xf]
        %v1835 = vld [vmem:[%s10 + $0x10] sm:$0xf]
        %v1836 = vld [vmem:[%s10 + $0x14] sm:$0xf]
        %v1837 = vld [vmem:[%s10 + $0x18] sm:$0xf]
        %v1838 = vld [vmem:[%s10 + $0x1c] sm:$0xf]
        %v1839 = vld [vmem:[%s10 + $0x20] sm:$0xf]
        %v1840 = vld [vmem:[%s10 + $0x24] sm:$0xf]
        %v1841 = vld [vmem:[%s10 + $0x28] sm:$0xf]
        %v1842 = vld [vmem:[%s10 + $0x2c] sm:$0xf]
        %v1843 = vld [vmem:[%s10 + $0x30] sm:$0xf]
        %v1844 = vld [vmem:[%s10 + $0x34] sm:$0xf]
        %v1845 = vld [vmem:[%s10 + $0x38] sm:$0xf]
        %v1846 = vld [vmem:[%s10 + $0x3c] sm:$0xf]
        %v1847 = vld [vmem:[%s10 + $0x40] sm:$0xf]
        %v1848 = vld [vmem:[%s10 + $0x44] sm:$0xf]
        %v1849 = vld [vmem:[%s10 + $0x48] sm:$0xf]
        %v1850 = vld [vmem:[%s10 + $0x4c] sm:$0xf]
        %v1851 = vld [vmem:[%s10 + $0x50] sm:$0xf]
        %v1852 = vld [vmem:[%s10 + $0x54] sm:$0xf]
        %v1853 = vld [vmem:[%s10 + $0x58] sm:$0xf]
        %v1854 = vld [vmem:[%s10 + $0x5c] sm:$0xf]
        %v1855 = vld [vmem:[%s10 + $0x60] sm:$0xf]
        %v1856 = vld [vmem:[%s10 + $0x64] sm:$0xf]
        %v1857 = vld [vmem:[%s10 + $0x68] sm:$0xf]
        %v1858 = vld [vmem:[%s10 + $0x6c] sm:$0xf]
        %v1859 = vld [vmem:[%s10 + $0x70] sm:$0xf]
        %v1860 = vld [vmem:[%s10 + $0x74] sm:$0xf]
        %v1861 = vld [vmem:[%s10 + $0x78] sm:$0xf]
        %v1862 = vld [vmem:[%s10 + $0x7c] sm:$0xf]
        %v1863 = vld [vmem:[%s10 + $0x80] sm:$0xf]
        %v1864 = vld [vmem:[%s10 + $0x84] sm:$0xf]
        %v1865 = vld [vmem:[%s10 + $0x88] sm:$0xf]
        %v1866 = vld [vmem:[%s10 + $0x8c] sm:$0xf]
        %v1867 = vld [vmem:[%s10 + $0x90] sm:$0xf]
        %v1868 = vld [vmem:[%s10 + $0x94] sm:$0xf]
        %v1869 = vld [vmem:[%s10 + $0x98] sm:$0xf]
        %v1870 = vld [vmem:[%s10 + $0x9c] sm:$0xf]
        %v1871 = vld [vmem:[%s10 + $0xa0] sm:$0xf]
        %v1872 = vld [vmem:[%s10 + $0xa4] sm:$0xf]
        %v1873 = vld [vmem:[%s10 + $0xa8] sm:$0xf]
        %v1874 = vld [vmem:[%s10 + $0xac] sm:$0xf]
        %v1875 = vld [vmem:[%s10 + $0xb0] sm:$0xf]
        %v1876 = vld [vmem:[%s10 + $0xb4] sm:$0xf]
        %v1877 = vld [vmem:[%s10 + $0xb8] sm:$0xf]
        %v1878 = vld [vmem:[%s10 + $0xbc] sm:$0xf]
        %v1879 = vld [vmem:[%s10 + $0xc0] sm:$0xf]
        %v1880 = vld [vmem:[%s10 + $0xc4] sm:$0xf]
        %v1881 = vld [vmem:[%s10 + $0xc8] sm:$0xf]
        %v1882 = vld [vmem:[%s10 + $0xcc] sm:$0xf]
        %v1883 = vld [vmem:[%s10 + $0xd0] sm:$0xf]
        %v1884 = vld [vmem:[%s10 + $0xd4] sm:$0xf]
        %v1885 = vld [vmem:[%s10 + $0xd8] sm:$0xf]
        %v1886 = vld [vmem:[%s10 + $0xdc] sm:$0xf]
        %v1887 = vld [vmem:[%s10 + $0xe0] sm:$0xf]
        %v1888 = vld [vmem:[%s10 + $0xe4] sm:$0xf]
        %v1889 = vld [vmem:[%s10 + $0xe8] sm:$0xf]
        %v1890 = vld [vmem:[%s10 + $0xec] sm:$0xf]
        %v1891 = vld [vmem:[%s10 + $0xf0] sm:$0xf]
        %v1892 = vld [vmem:[%s10 + $0xf4] sm:$0xf]
        %v1893 = vld [vmem:[%s10 + $0xf8] sm:$0xf]
        %v1894 = vld [vmem:[%s10 + $0xfc] sm:$0xf]
        %v1895 = vld [vmem:[%s11] sm:$0x1]
        %v1897 = vlaneseq
        %v1898 = vshrl.u32 %v1897, 7
        %v1899 = vsub.s32 0, %v1898
        %v1900 = vrot.slane %v1895, %v1899
        %v1966 = vunpack.c.l.b16 %v1831
        %v1967 = vunpack.c.l.b16 %v1832
        %v1968 = vunpack.c.l.b16 %v1833
        %v1969 = vunpack.c.l.b16 %v1834
        %v1970 = vunpack.c.l.b16 %v1835
        %v1971 = vunpack.c.l.b16 %v1836
        %v1972 = vunpack.c.l.b16 %v1837
        %v1973 = vunpack.c.l.b16 %v1838
        %v1974 = vunpack.c.l.b16 %v1839
        %v1975 = vunpack.c.l.b16 %v1840
        %v1976 = vunpack.c.l.b16 %v1841
        %v1977 = vunpack.c.l.b16 %v1842
        %v1978 = vunpack.c.l.b16 %v1843
        %v1979 = vunpack.c.l.b16 %v1844
        %v1980 = vunpack.c.l.b16 %v1845
        %v1981 = vunpack.c.l.b16 %v1846
        %v1982 = vunpack.c.l.b16 %v1847
        %v1983 = vunpack.c.l.b16 %v1848
        %v1984 = vunpack.c.l.b16 %v1849
        %v1985 = vunpack.c.l.b16 %v1850
        %v1986 = vunpack.c.l.b16 %v1851
        %v1987 = vunpack.c.l.b16 %v1852
        %v1988 = vunpack.c.l.b16 %v1853
        %v1989 = vunpack.c.l.b16 %v1854
        %v1990 = vunpack.c.l.b16 %v1855
        %v1991 = vunpack.c.l.b16 %v1856
        %v1992 = vunpack.c.l.b16 %v1857
        %v1993 = vunpack.c.l.b16 %v1858
        %v1994 = vunpack.c.l.b16 %v1859
        %v1995 = vunpack.c.l.b16 %v1860
        %v1996 = vunpack.c.l.b16 %v1861
        %v1997 = vunpack.c.l.b16 %v1862
        %v1998 = vunpack.c.l.b16 %v1863
        %v1999 = vunpack.c.l.b16 %v1864
        %v2000 = vunpack.c.l.b16 %v1865
        %v2001 = vunpack.c.l.b16 %v1866
        %v2002 = vunpack.c.l.b16 %v1867
        %v2003 = vunpack.c.l.b16 %v1868
        %v2004 = vunpack.c.l.b16 %v1869
        %v2005 = vunpack.c.l.b16 %v1870
        %v2006 = vunpack.c.l.b16 %v1871
        %v2007 = vunpack.c.l.b16 %v1872
        %v2008 = vunpack.c.l.b16 %v1873
        %v2009 = vunpack.c.l.b16 %v1874
        %v2010 = vunpack.c.l.b16 %v1875
        %v2011 = vunpack.c.l.b16 %v1876
        %v2012 = vunpack.c.l.b16 %v1877
        %v2013 = vunpack.c.l.b16 %v1878
        %v2014 = vunpack.c.l.b16 %v1879
        %v2015 = vunpack.c.l.b16 %v1880
        %v2016 = vunpack.c.l.b16 %v1881
        %v2017 = vunpack.c.l.b16 %v1882
        %v2018 = vunpack.c.l.b16 %v1883
        %v2019 = vunpack.c.l.b16 %v1884
        %v2020 = vunpack.c.l.b16 %v1885
        %v2021 = vunpack.c.l.b16 %v1886
        %v2022 = vunpack.c.l.b16 %v1887
        %v2023 = vunpack.c.l.b16 %v1888
        %v2024 = vunpack.c.l.b16 %v1889
        %v2025 = vunpack.c.l.b16 %v1890
        %v2026 = vunpack.c.l.b16 %v1891
        %v2027 = vunpack.c.l.b16 %v1892
        %v2028 = vunpack.c.l.b16 %v1893
        %v2029 = vunpack.c.l.b16 %v1894
        %v2030 = vpack.c.b16 %v1967, %v1966
        %v2031 = vpack.c.b16 %v1969, %v1968
        %v2032 = vpack.c.b16 %v1971, %v1970
        %v2033 = vpack.c.b16 %v1973, %v1972
        %v2034 = vpack.c.b16 %v1975, %v1974
        %v2035 = vpack.c.b16 %v1977, %v1976
        %v2036 = vpack.c.b16 %v1979, %v1978
        %v2037 = vpack.c.b16 %v1981, %v1980
        %v2038 = vpack.c.b16 %v1983, %v1982
        %v2039 = vpack.c.b16 %v1985, %v1984
        %v2040 = vpack.c.b16 %v1987, %v1986
        %v2041 = vpack.c.b16 %v1989, %v1988
        %v2042 = vpack.c.b16 %v1991, %v1990
        %v2043 = vpack.c.b16 %v1993, %v1992
        %v2044 = vpack.c.b16 %v1995, %v1994
        %v2045 = vpack.c.b16 %v1997, %v1996
        %v2046 = vpack.c.b16 %v1999, %v1998
        %v2047 = vpack.c.b16 %v2001, %v2000
        %v2048 = vpack.c.b16 %v2003, %v2002
        %v2049 = vpack.c.b16 %v2005, %v2004
        %v2050 = vpack.c.b16 %v2007, %v2006
        %v2051 = vpack.c.b16 %v2009, %v2008
        %v2052 = vpack.c.b16 %v2011, %v2010
        %v2053 = vpack.c.b16 %v2013, %v2012
        %v2054 = vpack.c.b16 %v2015, %v2014
        %v2055 = vpack.c.b16 %v2017, %v2016
        %v2056 = vpack.c.b16 %v2019, %v2018
        %v2057 = vpack.c.b16 %v2021, %v2020
        %v2058 = vpack.c.b16 %v2023, %v2022
        %v2059 = vpack.c.b16 %v2025, %v2024
        %v2060 = vpack.c.b16 %v2027, %v2026
        %v2061 = vpack.c.b16 %v2029, %v2028
        %2094 = vmatprep.subr.bf16.mxu0 0
        %2095 = vmatpush1.bf16.msra.mxu0 %v2030
        %2096 = vmatprep.subr.bf16.mxu0 0
        %2097 = vmatpush1.bf16.msra.mxu0 %v2031
        %2098 = vmatprep.subr.bf16.mxu0 0
        %2099 = vmatpush1.bf16.msra.mxu0 %v2032
        %2100 = vmatprep.subr.bf16.mxu0 0
        %2101 = vmatpush1.bf16.msra.mxu0 %v2033
        %2102 = vmatprep.subr.bf16.mxu0 0
        %2103 = vmatpush1.bf16.msra.mxu0 %v2034
        %2104 = vmatprep.subr.bf16.mxu0 0
        %2105 = vmatpush1.bf16.msra.mxu0 %v2035
        %2106 = vmatprep.subr.bf16.mxu0 0
        %2107 = vmatpush1.bf16.msra.mxu0 %v2036
        %2108 = vmatprep.subr.bf16.mxu0 0
        %2109 = vmatpush1.bf16.msra.mxu0 %v2037
        %2110 = vmatprep.subr.bf16.mxu0 0
        %2111 = vmatpush1.bf16.msra.mxu0 %v2038
        %2112 = vmatprep.subr.bf16.mxu0 0
        %2113 = vmatpush1.bf16.msra.mxu0 %v2039
        %2114 = vmatprep.subr.bf16.mxu0 0
        %2115 = vmatpush1.bf16.msra.mxu0 %v2040
        %2116 = vmatprep.subr.bf16.mxu0 0
        %2117 = vmatpush1.bf16.msra.mxu0 %v2041
        %2118 = vmatprep.subr.bf16.mxu0 0
        %2119 = vmatpush1.bf16.msra.mxu0 %v2042
        %2120 = vmatprep.subr.bf16.mxu0 0
        %2121 = vmatpush1.bf16.msra.mxu0 %v2043
        %2122 = vmatprep.subr.bf16.mxu0 0
        %2123 = vmatpush1.bf16.msra.mxu0 %v2044
        %2124 = vmatprep.subr.bf16.mxu0 0
        %2125 = vmatpush1.bf16.msra.mxu0 %v2045
        %2126 = vmatprep.mubr.bf16.mxu0 %v1828
        %2127 = vmatmul.mubr.bf16.gmra.mrb[0].mxu0 %v1827
        %v2128 = vpop.f32.mrb[0].mxu0
        %v2129 = vadd.f32 %v1900, %v2128
        %v2130 = vpop.f32.mrb[0].mxu0
        %v2131 = vpop.f32.mrb[0].mxu0
        %v2132 = vpop.f32.mrb[0].mxu0
        %2133 = vdwg.mxu0
        %2134 = vmatprep.subr.bf16.mxu0 0
        %2135 = vmatpush1.bf16.msra.mxu0 %v2046
        %2136 = vmatprep.subr.bf16.mxu0 0
        %2137 = vmatpush1.bf16.msra.mxu0 %v2047
        %2138 = vmatprep.subr.bf16.mxu0 0
        %2139 = vmatpush1.bf16.msra.mxu0 %v2048
        %2140 = vmatprep.subr.bf16.mxu0 0
        %2141 = vmatpush1.bf16.msra.mxu0 %v2049
        %2142 = vmatprep.subr.bf16.mxu0 0
        %2143 = vmatpush1.bf16.msra.mxu0 %v2050
        %2144 = vmatprep.subr.bf16.mxu0 0
        %2145 = vmatpush1.bf16.msra.mxu0 %v2051
        %2146 = vmatprep.subr.bf16.mxu0 0
        %2147 = vmatpush1.bf16.msra.mxu0 %v2052
        %2148 = vmatprep.subr.bf16.mxu0 0
        %2149 = vmatpush1.bf16.msra.mxu0 %v2053
        %2150 = vmatprep.subr.bf16.mxu0 0
        %2151 = vmatpush1.bf16.msra.mxu0 %v2054
        %2152 = vmatprep.subr.bf16.mxu0 0
        %2153 = vmatpush1.bf16.msra.mxu0 %v2055
        %2154 = vmatprep.subr.bf16.mxu0 0
        %2155 = vmatpush1.bf16.msra.mxu0 %v2056
        %2156 = vmatprep.subr.bf16.mxu0 0
        %2157 = vmatpush1.bf16.msra.mxu0 %v2057
        %2158 = vmatprep.subr.bf16.mxu0 0
        %2159 = vmatpush1.bf16.msra.mxu0 %v2058
        %2160 = vmatprep.subr.bf16.mxu0 0
        %2161 = vmatpush1.bf16.msra.mxu0 %v2059
        %2162 = vmatprep.subr.bf16.mxu0 0
        %2163 = vmatpush1.bf16.msra.mxu0 %v2060
        %2164 = vmatprep.subr.bf16.mxu0 0
        %2165 = vmatpush1.bf16.msra.mxu0 %v2061
        %2166 = vmatprep.mubr.bf16.mxu0 %v1830
        %2167 = vmatmul.mubr.bf16.gmra.mrb[0].mxu0 %v1829
        %v2168 = vpop.f32.mrb[0].mxu0
        %v2169 = vadd.f32 %v2129, %v2168
        %v2170 = vpop.f32.mrb[0].mxu0
        %v2171 = vpop.f32.mrb[0].mxu0
        %v2172 = vpop.f32.mrb[0].mxu0
        %2173 = vdwg.mxu0
        %v2174 = vadd.f32 %v1498, %v2169
        %2175 = vst [vmem:[%s404] sm:$0xff] %v2174
        %s2176 = sand.u32 %s291, 1
        %s2177 = scalar_lea.sflag [#allocation3], %s2176
        %s2178 = sand.u32 %s291, 1
        %s2179 = smul.addr %s2178, 8
        %s2180 = scalar_lea.vmem [#allocation2], %s2179
        // Predicated region
        $region69: #{block_forward.1} parent=67 // pred_check
          %p2181 = pneg %p301
        $region70: #{block_forward.1} parent=67 // pred_check_branch
          %2183 = sbr.rel (%p2181) target = $region72
        $region71: #{block_forward.1} parent=67 // pred_region
          %s2185 = ssub.s32 128, 128
          %2186 = vsyncadd %s2177, %s2185
          %s2187 = smul.addr %s26, 128
          %s2188 = scalar_lea.hbm %s12, %s2187
          %s2190 = sshll.u32 %s2180, 4
          %s2191 = int_to_ptr.vmem [resolvable:$true] %s2190
          %2193 = dma.vmem_to_hbm [thread:$0]  %s2191, 128, %s2188, %s2177
        $region72: #{block_forward.1} parent=67 // pred_fallthru
          _
      $region68: #{block_forward.1} parent=5 // pred_fallthru
        _
      %p2194 = scmp.le.s32.totalorder 2, %s21
      // Predicated region
      $region73: #{block_forward.1} parent=5 // pred_check
        %p2195 = pneg %p2194
      $region74: #{block_forward.1} parent=5 // pred_check_branch
        %2197 = sbr.rel (%p2195) target = $region76
      $region75: #{block_forward.1} parent=5 // pred_region
        %s2198 = ssub.s32 %s21, 2
        // Predicated region
        $region77: #{block_forward.1} parent=75 // pred_check
          %p2199 = pneg %p307
        $region78: #{block_forward.1} parent=75 // pred_check_branch
          %2201 = sbr.rel (%p2199) target = $region80
        $region79: #{block_forward.1} parent=75 // pred_region
          %s2202 = sand.u32 %s292, 1
          %s2203 = scalar_lea.sflag [#allocation3], %s2202
          %s2204 = sand.u32 %s292, 1
          %s2205 = smul.addr %s2204, 8
          %s2206 = scalar_lea.vmem [#allocation2], %s2205
          %2207 = dma.done %s2203, 128
        $region80: #{block_forward.1} parent=75 // pred_fallthru
          _
      $region76: #{block_forward.1} parent=5 // pred_fallthru
        _
    $region6: #{block_forward.1} parent=1 // loop_footer
      %s25 = sadd.s32 1, %s21
    $region7: #{block_forward.1} parent=1 // loop_footer_branch
      %20 = sbr.rel target = $region3
    $region8: #{block_forward.1} parent=1 // loop_exit
      _
    %2208 = vsyncpa [#allocation3], 1
    %s2209 = scalar_lea.sflag [#allocation3], 1
    %2210 = vsyncpa %s2209, 1

</llo_original>
